<compile_context>
chip_gen: v7x
topology: tpu7x:2x2x1
jax: 0.10.0
libtpu: 0.0.40
codegen_flags: <defaults>
</compile_context>

<pallas_src>
import functools

import jax
import jax.numpy as jnp
from jax import lax
from jax.experimental import pallas as pl
from jax.experimental.pallas import tpu as pltpu


# ----------------------------------------------------------------------------------------
# Kernel A: relational aggregation  h^T = relu( sum_r (W_r^T x^T) @ A_r^T + b1^T )
# Grid = (dst blocks [parallel], relation chunks [arbitrary / reduction]).
# ----------------------------------------------------------------------------------------
def relagg_kernel(a_ref, xt_ref, wrt_ref, b1t_ref, ht_ref):
    # a_ref   : (rel_chunk, N_src, dst_blk) bf16   transposed relation adjacency slab
    # xt_ref  : (F_in, N_src)               f32    node features, transposed (lane-dense)
    # wrt_ref : (rel_chunk, K, F_in)        f32    per-relation weights, transposed
    # b1t_ref : (K, 1)                      f32    conv1 bias, transposed
    # ht_ref  : (K, dst_blk)                f32    resident accumulator block of h^T
    rc = pl.program_id(1)

    @pl.when(rc == 0)
    def _init():
        ht_ref[...] = jnp.zeros_like(ht_ref)

    xt = xt_ref[...]
    rel_chunk, _, f_in = wrt_ref.shape

    acc = ht_ref[...]
    for j in range(rel_chunk):                       # small static unroll
        w_r = wrt_ref[j]                             # (K, F_in)
        # Per-relation transform built directly lane-dense on the VPU: (K,1)*(1,N) outer adds.
        xw_t = w_r[:, 0:1] * xt[0:1, :]              # (K, N_src)
        for f in range(1, f_in):
            xw_t = xw_t + w_r[:, f:f + 1] * xt[f:f + 1, :]
        # K=8 rows on the sublane axis, dst nodes on the lane axis -> lane-dense MXU output;
        # contraction length = N_src per pass (>= 256 for realistic batched graphs).
        acc = acc + jnp.dot(xw_t.astype(jnp.bfloat16), a_ref[j],
                            preferred_element_type=jnp.float32)
    ht_ref[...] = acc

    @pl.when(rc == pl.num_programs(1) - 1)
    def _finalize():                                 # conv1 bias + F.relu
        ht_ref[...] = jnp.maximum(ht_ref[...] + b1t_ref[...], 0.0)


# ----------------------------------------------------------------------------------------
# Kernel B: SAGPool(ratio=1) gate -> GraphConv(K -> L1) -> per-graph max pool -> fc -> sigmoid
# Single program; all operands are tiny compared with the relational aggregation.
# ----------------------------------------------------------------------------------------
def epilogue_kernel(ht_ref, a_ref, rin_ref, rout_ref, valid_ref,
                    ws_ref, bs_ref, w2_ref, b2_ref, wfc_ref, bfc_ref, out_ref):
    h = jnp.transpose(ht_ref[...], (1, 0))           # (N, K): one cheap 8 x N transpose
    A = a_ref[...]                                   # (N, N) bf16, A[dst, src]
    r_in = rin_ref[...]                              # (N, 1) rsqrt(clamped in-degree)
    r_out = rout_ref[...]                            # (N, 1) rsqrt(clamped out-degree)

    # SAGPool score layer: GraphConv(K -> 1), norm='both' folded as vector scalings.
    hw = jnp.dot(h, ws_ref[...], preferred_element_type=jnp.float32)             # (N, 1)
    score = r_in * jnp.dot(A, (r_out * hw).astype(jnp.bfloat16),
                           preferred_element_type=jnp.float32) + bs_ref[0, 0]
    feat = h * jnp.tanh(score)                                                    # (N, K)

    # conv2: GraphConv(K -> L1p); L1 zero-padded to 128 lanes -> unmasked stores.
    fw = jnp.dot(feat, w2_ref[...], preferred_element_type=jnp.float32)           # (N, L1p)
    h2 = r_in * jnp.dot(A, (r_out * fw).astype(jnp.bfloat16),
                        preferred_element_type=jnp.float32) + b2_ref[...]         # (N, L1p)

    # MaxPooling: graphs are contiguous node blocks -> reshape + max (no (B,N,L1) broadcast).
    neg = jnp.finfo(jnp.float32).min
    h2 = jnp.where(valid_ref[...] > 0.0, h2, neg)
    n_graphs = out_ref.shape[0]
    n_per = h2.shape[0] // n_graphs
    pooled = jnp.max(h2.reshape(n_graphs, n_per, h2.shape[1]), axis=1)            # (B, L1p)

    # fc1 + sigmoid
    logits = jnp.dot(pooled, wfc_ref[...], preferred_element_type=jnp.float32) + bfc_ref[0, 0]
    out_ref[...] = jax.nn.sigmoid(logits)


# ----------------------------------------------------------------------------------------
# One-time preparation (the graph and the parameters are fixed inputs; do NOT redo per call)
# ----------------------------------------------------------------------------------------
def mynet_prepare_graph(a_rel, a):
    """a_rel: (R, N, N) with a_rel[r, dst, src];  a = sum_r a_rel."""
    R, N, _ = a_rel.shape
    # Transposed per-relation adjacency [r, src, dst] with the RelGraphConv self-loop folded
    # in as an extra identity pseudo-relation; small integer edge counts -> exact in bf16.
    a_rel_t = jnp.concatenate(
        [jnp.transpose(a_rel, (0, 2, 1)), jnp.eye(N, dtype=a_rel.dtype)[None]],
        axis=0).astype(jnp.bfloat16)                                            # (R+1, N, N)
    a_bf = a.astype(jnp.bfloat16)                                               # (N, N)
    r_in = lax.rsqrt(jnp.maximum(jnp.sum(a, axis=1, keepdims=True), 1.0))       # (N, 1)
    r_out = lax.rsqrt(jnp.maximum(jnp.sum(a, axis=0), 1.0)).reshape(N, 1)       # (N, 1)
    return a_rel_t, a_bf, r_in, r_out


def mynet_prepare_params(params, l1_pad=128):
    R, F_in, K = params["w_rel"].shape
    L1 = params["w2"].shape[1]
    pad = l1_pad - L1
    assert pad >= 0
    w_rel_t = jnp.transpose(params["w_rel"], (0, 2, 1))                         # (R, K, F_in)
    wrt = jnp.concatenate([w_rel_t, params["w_loop"].T[None]], axis=0)          # (R+1, K, F_in)
    return dict(
        wrt=wrt,
        b1t=params["b1"].reshape(K, 1),
        ws=params["w_s"],
        bs=params["b_s"].reshape(1, 1),
        w2=jnp.pad(params["w2"], ((0, 0), (0, pad))),      # zero-pad 120 -> 128 (exact)
        b2=jnp.pad(params["b2"], ((0, 0), (0, pad))),
        wfc=jnp.pad(params["w_fc"], ((0, pad), (0, 0))),
        bfc=params["b_fc"].reshape(1, 1),
    )


# ----------------------------------------------------------------------------------------
# Forward
# ----------------------------------------------------------------------------------------
def mynet_forward(graph_prep, param_prep, x, valid, *, batch_size,
                  rel_chunk=None, dst_blk=None):
    a_rel_t, a_bf, r_in, r_out = graph_prep
    R_aug, N, _ = a_rel_t.shape
    _, K, F_in = param_prep["wrt"].shape
    assert N % 8 == 0, "pad the batched graph so the total node count is a multiple of 8"
    assert N % batch_size == 0 and (N // batch_size) % 8 == 0, \
        "graphs must be contiguous equal-size node blocks with n_per a multiple of 8"

    # dst-block size: full N for small graphs, else a multiple of 128 (parallel axis feeds
    # v7x's two TensorCores and bounds the per-step a_rel_t slab).
    if dst_blk is None:
        if N % 128 == 0 and N > 512:
            dst_blk = 512 if N % 512 == 0 else (256 if N % 256 == 0 else 128)
        else:
            dst_blk = N
    assert N % dst_blk == 0

    # relation-chunk size: largest divisor of R_aug whose bf16 slab stays ~<= 4 MiB
    # (double-buffered by the BlockSpec pipeline -> small, v7x-portable VMEM footprint).
    if rel_chunk is None:
        rel_chunk = 1
        for cand in (14, 7, 4, 2, 1):
            if R_aug % cand == 0 and cand * N * dst_blk * 2 <= (4 << 20):
                rel_chunk = cand
                break
    assert R_aug % rel_chunk == 0

    x_t = jnp.transpose(x).astype(jnp.float32)                      # (F_in, N) lane-dense

    # ---- Kernel A: pipelined, transposed relational aggregation -> h^T (K, N)
    h_t = pl.pallas_call(
        relagg_kernel,
        out_shape=jax.ShapeDtypeStruct((K, N), jnp.float32),
        grid=(N // dst_blk, R_aug // rel_chunk),
        in_specs=[
            pl.BlockSpec((rel_chunk, N, dst_blk), lambda d, rc: (rc, 0, d)),
            pl.BlockSpec((F_in, N), lambda d, rc: (0, 0)),
            pl.BlockSpec((rel_chunk, K, F_in), lambda d, rc: (rc, 0, 0)),
            pl.BlockSpec((K, 1), lambda d, rc: (0, 0)),
        ],
        out_specs=pl.BlockSpec((K, dst_blk), lambda d, rc: (0, d)),
        compiler_params=pltpu.CompilerParams(
            dimension_semantics=("parallel", "arbitrary")),
    )(a_rel_t, x_t, param_prep["wrt"], param_prep["b1t"])

    # ---- Kernel B: SAGPool gate + conv2 + max pool + fc (single small program)
    vmem = pl.BlockSpec(memory_space=pltpu.MemorySpace.VMEM)
    smem = pl.BlockSpec(memory_space=pltpu.MemorySpace.SMEM)
    out = pl.pallas_call(
        epilogue_kernel,
        out_shape=jax.ShapeDtypeStruct((batch_size, 1), jnp.float32),
        in_specs=[vmem, vmem, vmem, vmem, vmem,      # h_t, A, r_in, r_out, valid
                  vmem, smem,                        # w_s, b_s (scalar -> SMEM)
                  vmem, vmem,                        # w2, b2
                  vmem, smem],                       # w_fc, b_fc (scalar -> SMEM)
        out_specs=vmem,
    )(h_t, a_bf, r_in, r_out, valid,
      param_prep["ws"], param_prep["bs"],
      param_prep["w2"], param_prep["b2"],
      param_prep["wfc"], param_prep["bfc"])
    return out


# ----------------------------------------------------------------------------------------
# Pure-JAX f32 reference of the same forward pass
# ----------------------------------------------------------------------------------------
def mynet_reference(a_rel, a, x, batch_size, params):
    h = x @ params["w_loop"] + params["b1"]
    h = h + jnp.einsum("rds,sf,rfk->dk", a_rel, x, params["w_rel"])
    h = jnp.maximum(h, 0.0)
    deg_in = jnp.maximum(jnp.sum(a, axis=1, keepdims=True), 1.0)
    deg_out = jnp.maximum(jnp.sum(a, axis=0, keepdims=True), 1.0)
    a_norm = a * lax.rsqrt(deg_in) * lax.rsqrt(deg_out)
    score = a_norm @ (h @ params["w_s"]) + params["b_s"]
    feat = h * jnp.tanh(score)
    h2 = a_norm @ (feat @ params["w2"]) + params["b2"]
    pooled = jnp.max(h2.reshape(batch_size, -1, h2.shape[1]), axis=1)
    return jax.nn.sigmoid(pooled @ params["w_fc"] + params["b_fc"])


if __name__ == "__main__":
    key = jax.random.PRNGKey(0)

    # small synthetic batched graph (contiguous per-graph node blocks, as in dgl.batch)
    B = 2          # graphs in batch
    n_per = 8      # nodes per graph
    N = B * n_per  # 16 total nodes
    E_per = 20     # edges per graph
    R = 27         # relation types (from MyNet.__init__)
    F_in = 2
    K = 8
    L1 = 120

    keys = jax.random.split(key, 6)
    src = jax.random.randint(keys[0], (B, E_per), 0, n_per)
    dst = jax.random.randint(keys[1], (B, E_per), 0, n_per)
    etype = jax.random.randint(keys[2], (B, E_per), 0, R)

    offs = (jnp.arange(B) * n_per)[:, None]
    src_g = (src + offs).reshape(-1)
    dst_g = (dst + offs).reshape(-1)
    et_g = etype.reshape(-1)

    a_rel = jnp.zeros((R, N, N), jnp.float32).at[et_g, dst_g, src_g].add(1.0)   # A_r[dst, src]
    a = jnp.sum(a_rel, axis=0)                                                  # (N, N)
    x = jax.random.normal(keys[3], (N, F_in), jnp.float32)
    valid = jnp.ones((N, 1), jnp.float32)   # every node is a real node in this demo

    # deterministic parameter init (shapes as implied by MyNet.__init__)
    pk = jax.random.split(keys[4], 5)
    params = dict(
        w_rel=0.1 * jax.random.normal(pk[0], (R, F_in, K), jnp.float32),   # RelGraphConv weights
        w_loop=0.1 * jax.random.normal(pk[1], (F_in, K), jnp.float32),     # RelGraphConv self-loop
        b1=jnp.zeros((1, K), jnp.float32),                                 # RelGraphConv bias
        w_s=0.1 * jax.random.normal(pk[2], (K, 1), jnp.float32),           # SAGPool score weight
        b_s=jnp.zeros((1, 1), jnp.float32),                                # SAGPool score bias
        w2=0.1 * jax.random.normal(pk[3], (K, L1), jnp.float32),           # conv2 GraphConv weight
        b2=jnp.zeros((1, L1), jnp.float32),                                # conv2 GraphConv bias
        w_fc=0.1 * jax.random.normal(pk[4], (L1, 1), jnp.float32),         # fc1 weight (transposed)
        b_fc=jnp.zeros((1, 1), jnp.float32),                               # fc1 bias
    )

    # One-time prep (graph & params are fixed inputs): hoisted out of the per-call path.
    graph_prep = mynet_prepare_graph(a_rel, a)
    param_prep = mynet_prepare_params(params)

    fwd = jax.jit(functools.partial(mynet_forward, batch_size=B))
    out = jax.block_until_ready(fwd(graph_prep, param_prep, x, valid))

    ref = mynet_reference(a_rel, a, x, B, params)

    assert out.shape == (B, 1)
    assert bool(jnp.all((out > 0.0) & (out < 1.0)))
    # bf16 is only used on the adjacency-matmul operands -> stays close to the f32 reference
    assert bool(jnp.allclose(out, ref, atol=2e-2)), (out, ref)
    print("KERNEL_OK")
</pallas_src>

<mosaic_0001>
module attributes {stable_mosaic.version = 11 : i64} {
  func.func @relagg_kernel(%arg0: i32, %arg1: i32, %arg2: memref<14x16x16xbf16, #tpu.memory_space<vmem>>, %arg3: memref<2x16xf32, #tpu.memory_space<vmem>>, %arg4: memref<14x8x2xf32, #tpu.memory_space<vmem>>, %arg5: memref<8x1xf32, #tpu.memory_space<vmem>>, %arg6: memref<8x16xf32, #tpu.memory_space<vmem>>) attributes {dimension_semantics = [#tpu.dimension_semantics<parallel>, #tpu.dimension_semantics<arbitrary>], iteration_bounds = array<i64: 1, 2>, scalar_prefetch = 0 : i64, scratch_operands = 0 : i64, tpu.core_type = #tpu.core_type<tc>, window_params = [{transform_indices = @transform_0, window_bounds = array<i64: 14, 16, 16>}, {pipeline_mode = #tpu.pipeline_mode<synchronous>, transform_indices = @transform_1, window_bounds = array<i64: 2, 16>}, {transform_indices = @transform_2, window_bounds = array<i64: 14, 8, 2>}, {pipeline_mode = #tpu.pipeline_mode<synchronous>, transform_indices = @transform_3, window_bounds = array<i64: 8, 1>}, {transform_indices = @transform_4, window_bounds = array<i64: 8, 16>}]} {
    %c0_i32 = arith.constant 0 : i32
    %0 = arith.cmpi eq, %arg1, %c0_i32 : i32
    %1 = arith.extui %0 : i1 to i32
    %c0_i32_0 = arith.constant 0 : i32
    %2 = arith.cmpi ne, %1, %c0_i32_0 : i32
    scf.if %2 {
      %cst_91 = arith.constant 0.000000e+00 : f32
      %261 = vector.broadcast %cst_91 : f32 to vector<8x16xf32>
      %c0_92 = arith.constant 0 : index
      %c0_93 = arith.constant 0 : index
      %262 = vector.load %arg6[%c0_92, %c0_93] : memref<8x16xf32, #tpu.memory_space<vmem>>, vector<8x16xf32>
      tpu.vector_store %arg6[%c0_92, %c0_93], %261 {strides = array<i32>} : memref<8x16xf32, #tpu.memory_space<vmem>>, vector<8x16xf32>,
    } else {
    }
    %c0 = arith.constant 0 : index
    %c0_1 = arith.constant 0 : index
    %3 = vector.load %arg3[%c0, %c0_1] : memref<2x16xf32, #tpu.memory_space<vmem>>, vector<2x16xf32>
    %c0_2 = arith.constant 0 : index
    %c0_3 = arith.constant 0 : index
    %4 = vector.load %arg6[%c0_2, %c0_3] : memref<8x16xf32, #tpu.memory_space<vmem>>, vector<8x16xf32>
    %c0_4 = arith.constant 0 : index
    %c0_5 = arith.constant 0 : index
    %c0_6 = arith.constant 0 : index
    %5 = vector.load %arg4[%c0_4, %c0_5, %c0_6] : memref<14x8x2xf32, #tpu.memory_space<vmem>>, vector<1x8x2xf32>
    %6 = vector.shape_cast %5 : vector<1x8x2xf32> to vector<8x2xf32>
    %7 = vector.extract_strided_slice %6 {offsets = [0, 0], sizes = [8, 1], strides = [1, 1]} : vector<8x2xf32> to vector<8x1xf32>
    %8 = vector.extract_strided_slice %3 {offsets = [0, 0], sizes = [1, 16], strides = [1, 1]} : vector<2x16xf32> to vector<1x16xf32>
    %9 = vector.broadcast %7 : vector<8x1xf32> to vector<8x16xf32>
    %10 = vector.broadcast %8 : vector<1x16xf32> to vector<8x16xf32>
    %11 = arith.mulf %9, %10 : vector<8x16xf32>
    %12 = vector.extract_strided_slice %6 {offsets = [0, 1], sizes = [8, 1], strides = [1, 1]} : vector<8x2xf32> to vector<8x1xf32>
    %13 = vector.extract_strided_slice %3 {offsets = [1, 0], sizes = [1, 16], strides = [1, 1]} : vector<2x16xf32> to vector<1x16xf32>
    %14 = vector.broadcast %12 : vector<8x1xf32> to vector<8x16xf32>
    %15 = vector.broadcast %13 : vector<1x16xf32> to vector<8x16xf32>
    %16 = arith.mulf %14, %15 : vector<8x16xf32>
    %17 = arith.addf %11, %16 : vector<8x16xf32>
    %18 = arith.truncf %17 : vector<8x16xf32> to vector<8x16xbf16>
    %c0_7 = arith.constant 0 : index
    %c0_8 = arith.constant 0 : index
    %c0_9 = arith.constant 0 : index
    %19 = vector.load %arg2[%c0_7, %c0_8, %c0_9] : memref<14x16x16xbf16, #tpu.memory_space<vmem>>, vector<1x16x16xbf16>
    %20 = vector.shape_cast %19 : vector<1x16x16xbf16> to vector<16x16xbf16>
    %cst = arith.constant dense<0.000000e+00> : vector<8x16xf32>
    %21 = tpu.matmul %18, %20, %cst {dimension_numbers = #tpu.dot_dimension_numbers<[1], [0], [0], [1], [0, 0, 1, 1], [], []>} : vector<8x16xbf16>, vector<16x16xbf16>, vector<8x16xf32> -> vector<8x16xf32>
    %22 = arith.addf %4, %21 : vector<8x16xf32>
    %c1 = arith.constant 1 : index
    %c0_10 = arith.constant 0 : index
    %c0_11 = arith.constant 0 : index
    %23 = vector.load %arg4[%c1, %c0_10, %c0_11] : memref<14x8x2xf32, #tpu.memory_space<vmem>>, vector<1x8x2xf32>
    %24 = vector.shape_cast %23 : vector<1x8x2xf32> to vector<8x2xf32>
    %25 = vector.extract_strided_slice %24 {offsets = [0, 0], sizes = [8, 1], strides = [1, 1]} : vector<8x2xf32> to vector<8x1xf32>
    %26 = vector.extract_strided_slice %3 {offsets = [0, 0], sizes = [1, 16], strides = [1, 1]} : vector<2x16xf32> to vector<1x16xf32>
    %27 = vector.broadcast %25 : vector<8x1xf32> to vector<8x16xf32>
    %28 = vector.broadcast %26 : vector<1x16xf32> to vector<8x16xf32>
    %29 = arith.mulf %27, %28 : vector<8x16xf32>
    %30 = vector.extract_strided_slice %24 {offsets = [0, 1], sizes = [8, 1], strides = [1, 1]} : vector<8x2xf32> to vector<8x1xf32>
    %31 = vector.extract_strided_slice %3 {offsets = [1, 0], sizes = [1, 16], strides = [1, 1]} : vector<2x16xf32> to vector<1x16xf32>
    %32 = vector.broadcast %30 : vector<8x1xf32> to vector<8x16xf32>
    %33 = vector.broadcast %31 : vector<1x16xf32> to vector<8x16xf32>
    %34 = arith.mulf %32, %33 : vector<8x16xf32>
    %35 = arith.addf %29, %34 : vector<8x16xf32>
    %36 = arith.truncf %35 : vector<8x16xf32> to vector<8x16xbf16>
    %c1_12 = arith.constant 1 : index
    %c0_13 = arith.constant 0 : index
    %c0_14 = arith.constant 0 : index
    %37 = vector.load %arg2[%c1_12, %c0_13, %c0_14] : memref<14x16x16xbf16, #tpu.memory_space<vmem>>, vector<1x16x16xbf16>
    %38 = vector.shape_cast %37 : vector<1x16x16xbf16> to vector<16x16xbf16>
    %cst_15 = arith.constant dense<0.000000e+00> : vector<8x16xf32>
    %39 = tpu.matmul %36, %38, %cst_15 {dimension_numbers = #tpu.dot_dimension_numbers<[1], [0], [0], [1], [0, 0, 1, 1], [], []>} : vector<8x16xbf16>, vector<16x16xbf16>, vector<8x16xf32> -> vector<8x16xf32>
    %40 = arith.addf %22, %39 : vector<8x16xf32>
    %c2 = arith.constant 2 : index
    %c0_16 = arith.constant 0 : index
    %c0_17 = arith.constant 0 : index
    %41 = vector.load %arg4[%c2, %c0_16, %c0_17] : memref<14x8x2xf32, #tpu.memory_space<vmem>>, vector<1x8x2xf32>
    %42 = vector.shape_cast %41 : vector<1x8x2xf32> to vector<8x2xf32>
    %43 = vector.extract_strided_slice %42 {offsets = [0, 0], sizes = [8, 1], strides = [1, 1]} : vector<8x2xf32> to vector<8x1xf32>
    %44 = vector.extract_strided_slice %3 {offsets = [0, 0], sizes = [1, 16], strides = [1, 1]} : vector<2x16xf32> to vector<1x16xf32>
    %45 = vector.broadcast %43 : vector<8x1xf32> to vector<8x16xf32>
    %46 = vector.broadcast %44 : vector<1x16xf32> to vector<8x16xf32>
    %47 = arith.mulf %45, %46 : vector<8x16xf32>
    %48 = vector.extract_strided_slice %42 {offsets = [0, 1], sizes = [8, 1], strides = [1, 1]} : vector<8x2xf32> to vector<8x1xf32>
    %49 = vector.extract_strided_slice %3 {offsets = [1, 0], sizes = [1, 16], strides = [1, 1]} : vector<2x16xf32> to vector<1x16xf32>
    %50 = vector.broadcast %48 : vector<8x1xf32> to vector<8x16xf32>
    %51 = vector.broadcast %49 : vector<1x16xf32> to vector<8x16xf32>
    %52 = arith.mulf %50, %51 : vector<8x16xf32>
    %53 = arith.addf %47, %52 : vector<8x16xf32>
    %54 = arith.truncf %53 : vector<8x16xf32> to vector<8x16xbf16>
    %c2_18 = arith.constant 2 : index
    %c0_19 = arith.constant 0 : index
    %c0_20 = arith.constant 0 : index
    %55 = vector.load %arg2[%c2_18, %c0_19, %c0_20] : memref<14x16x16xbf16, #tpu.memory_space<vmem>>, vector<1x16x16xbf16>
    %56 = vector.shape_cast %55 : vector<1x16x16xbf16> to vector<16x16xbf16>
    %cst_21 = arith.constant dense<0.000000e+00> : vector<8x16xf32>
    %57 = tpu.matmul %54, %56, %cst_21 {dimension_numbers = #tpu.dot_dimension_numbers<[1], [0], [0], [1], [0, 0, 1, 1], [], []>} : vector<8x16xbf16>, vector<16x16xbf16>, vector<8x16xf32> -> vector<8x16xf32>
    %58 = arith.addf %40, %57 : vector<8x16xf32>
    %c3 = arith.constant 3 : index
    %c0_22 = arith.constant 0 : index
    %c0_23 = arith.constant 0 : index
    %59 = vector.load %arg4[%c3, %c0_22, %c0_23] : memref<14x8x2xf32, #tpu.memory_space<vmem>>, vector<1x8x2xf32>
    %60 = vector.shape_cast %59 : vector<1x8x2xf32> to vector<8x2xf32>
    %61 = vector.extract_strided_slice %60 {offsets = [0, 0], sizes = [8, 1], strides = [1, 1]} : vector<8x2xf32> to vector<8x1xf32>
    %62 = vector.extract_strided_slice %3 {offsets = [0, 0], sizes = [1, 16], strides = [1, 1]} : vector<2x16xf32> to vector<1x16xf32>
    %63 = vector.broadcast %61 : vector<8x1xf32> to vector<8x16xf32>
    %64 = vector.broadcast %62 : vector<1x16xf32> to vector<8x16xf32>
    %65 = arith.mulf %63, %64 : vector<8x16xf32>
    %66 = vector.extract_strided_slice %60 {offsets = [0, 1], sizes = [8, 1], strides = [1, 1]} : vector<8x2xf32> to vector<8x1xf32>
    %67 = vector.extract_strided_slice %3 {offsets = [1, 0], sizes = [1, 16], strides = [1, 1]} : vector<2x16xf32> to vector<1x16xf32>
    %68 = vector.broadcast %66 : vector<8x1xf32> to vector<8x16xf32>
    %69 = vector.broadcast %67 : vector<1x16xf32> to vector<8x16xf32>
    %70 = arith.mulf %68, %69 : vector<8x16xf32>
    %71 = arith.addf %65, %70 : vector<8x16xf32>
    %72 = arith.truncf %71 : vector<8x16xf32> to vector<8x16xbf16>
    %c3_24 = arith.constant 3 : index
    %c0_25 = arith.constant 0 : index
    %c0_26 = arith.constant 0 : index
    %73 = vector.load %arg2[%c3_24, %c0_25, %c0_26] : memref<14x16x16xbf16, #tpu.memory_space<vmem>>, vector<1x16x16xbf16>
    %74 = vector.shape_cast %73 : vector<1x16x16xbf16> to vector<16x16xbf16>
    %cst_27 = arith.constant dense<0.000000e+00> : vector<8x16xf32>
    %75 = tpu.matmul %72, %74, %cst_27 {dimension_numbers = #tpu.dot_dimension_numbers<[1], [0], [0], [1], [0, 0, 1, 1], [], []>} : vector<8x16xbf16>, vector<16x16xbf16>, vector<8x16xf32> -> vector<8x16xf32>
    %76 = arith.addf %58, %75 : vector<8x16xf32>
    %c4 = arith.constant 4 : index
    %c0_28 = arith.constant 0 : index
    %c0_29 = arith.constant 0 : index
    %77 = vector.load %arg4[%c4, %c0_28, %c0_29] : memref<14x8x2xf32, #tpu.memory_space<vmem>>, vector<1x8x2xf32>
    %78 = vector.shape_cast %77 : vector<1x8x2xf32> to vector<8x2xf32>
    %79 = vector.extract_strided_slice %78 {offsets = [0, 0], sizes = [8, 1], strides = [1, 1]} : vector<8x2xf32> to vector<8x1xf32>
    %80 = vector.extract_strided_slice %3 {offsets = [0, 0], sizes = [1, 16], strides = [1, 1]} : vector<2x16xf32> to vector<1x16xf32>
    %81 = vector.broadcast %79 : vector<8x1xf32> to vector<8x16xf32>
    %82 = vector.broadcast %80 : vector<1x16xf32> to vector<8x16xf32>
    %83 = arith.mulf %81, %82 : vector<8x16xf32>
    %84 = vector.extract_strided_slice %78 {offsets = [0, 1], sizes = [8, 1], strides = [1, 1]} : vector<8x2xf32> to vector<8x1xf32>
    %85 = vector.extract_strided_slice %3 {offsets = [1, 0], sizes = [1, 16], strides = [1, 1]} : vector<2x16xf32> to vector<1x16xf32>
    %86 = vector.broadcast %84 : vector<8x1xf32> to vector<8x16xf32>
    %87 = vector.broadcast %85 : vector<1x16xf32> to vector<8x16xf32>
    %88 = arith.mulf %86, %87 : vector<8x16xf32>
    %89 = arith.addf %83, %88 : vector<8x16xf32>
    %90 = arith.truncf %89 : vector<8x16xf32> to vector<8x16xbf16>
    %c4_30 = arith.constant 4 : index
    %c0_31 = arith.constant 0 : index
    %c0_32 = arith.constant 0 : index
    %91 = vector.load %arg2[%c4_30, %c0_31, %c0_32] : memref<14x16x16xbf16, #tpu.memory_space<vmem>>, vector<1x16x16xbf16>
    %92 = vector.shape_cast %91 : vector<1x16x16xbf16> to vector<16x16xbf16>
    %cst_33 = arith.constant dense<0.000000e+00> : vector<8x16xf32>
    %93 = tpu.matmul %90, %92, %cst_33 {dimension_numbers = #tpu.dot_dimension_numbers<[1], [0], [0], [1], [0, 0, 1, 1], [], []>} : vector<8x16xbf16>, vector<16x16xbf16>, vector<8x16xf32> -> vector<8x16xf32>
    %94 = arith.addf %76, %93 : vector<8x16xf32>
    %c5 = arith.constant 5 : index
    %c0_34 = arith.constant 0 : index
    %c0_35 = arith.constant 0 : index
    %95 = vector.load %arg4[%c5, %c0_34, %c0_35] : memref<14x8x2xf32, #tpu.memory_space<vmem>>, vector<1x8x2xf32>
    %96 = vector.shape_cast %95 : vector<1x8x2xf32> to vector<8x2xf32>
    %97 = vector.extract_strided_slice %96 {offsets = [0, 0], sizes = [8, 1], strides = [1, 1]} : vector<8x2xf32> to vector<8x1xf32>
    %98 = vector.extract_strided_slice %3 {offsets = [0, 0], sizes = [1, 16], strides = [1, 1]} : vector<2x16xf32> to vector<1x16xf32>
    %99 = vector.broadcast %97 : vector<8x1xf32> to vector<8x16xf32>
    %100 = vector.broadcast %98 : vector<1x16xf32> to vector<8x16xf32>
    %101 = arith.mulf %99, %100 : vector<8x16xf32>
    %102 = vector.extract_strided_slice %96 {offsets = [0, 1], sizes = [8, 1], strides = [1, 1]} : vector<8x2xf32> to vector<8x1xf32>
    %103 = vector.extract_strided_slice %3 {offsets = [1, 0], sizes = [1, 16], strides = [1, 1]} : vector<2x16xf32> to vector<1x16xf32>
    %104 = vector.broadcast %102 : vector<8x1xf32> to vector<8x16xf32>
    %105 = vector.broadcast %103 : vector<1x16xf32> to vector<8x16xf32>
    %106 = arith.mulf %104, %105 : vector<8x16xf32>
    %107 = arith.addf %101, %106 : vector<8x16xf32>
    %108 = arith.truncf %107 : vector<8x16xf32> to vector<8x16xbf16>
    %c5_36 = arith.constant 5 : index
    %c0_37 = arith.constant 0 : index
    %c0_38 = arith.constant 0 : index
    %109 = vector.load %arg2[%c5_36, %c0_37, %c0_38] : memref<14x16x16xbf16, #tpu.memory_space<vmem>>, vector<1x16x16xbf16>
    %110 = vector.shape_cast %109 : vector<1x16x16xbf16> to vector<16x16xbf16>
    %cst_39 = arith.constant dense<0.000000e+00> : vector<8x16xf32>
    %111 = tpu.matmul %108, %110, %cst_39 {dimension_numbers = #tpu.dot_dimension_numbers<[1], [0], [0], [1], [0, 0, 1, 1], [], []>} : vector<8x16xbf16>, vector<16x16xbf16>, vector<8x16xf32> -> vector<8x16xf32>
    %112 = arith.addf %94, %111 : vector<8x16xf32>
    %c6 = arith.constant 6 : index
    %c0_40 = arith.constant 0 : index
    %c0_41 = arith.constant 0 : index
    %113 = vector.load %arg4[%c6, %c0_40, %c0_41] : memref<14x8x2xf32, #tpu.memory_space<vmem>>, vector<1x8x2xf32>
    %114 = vector.shape_cast %113 : vector<1x8x2xf32> to vector<8x2xf32>
    %115 = vector.extract_strided_slice %114 {offsets = [0, 0], sizes = [8, 1], strides = [1, 1]} : vector<8x2xf32> to vector<8x1xf32>
    %116 = vector.extract_strided_slice %3 {offsets = [0, 0], sizes = [1, 16], strides = [1, 1]} : vector<2x16xf32> to vector<1x16xf32>
    %117 = vector.broadcast %115 : vector<8x1xf32> to vector<8x16xf32>
    %118 = vector.broadcast %116 : vector<1x16xf32> to vector<8x16xf32>
    %119 = arith.mulf %117, %118 : vector<8x16xf32>
    %120 = vector.extract_strided_slice %114 {offsets = [0, 1], sizes = [8, 1], strides = [1, 1]} : vector<8x2xf32> to vector<8x1xf32>
    %121 = vector.extract_strided_slice %3 {offsets = [1, 0], sizes = [1, 16], strides = [1, 1]} : vector<2x16xf32> to vector<1x16xf32>
    %122 = vector.broadcast %120 : vector<8x1xf32> to vector<8x16xf32>
    %123 = vector.broadcast %121 : vector<1x16xf32> to vector<8x16xf32>
    %124 = arith.mulf %122, %123 : vector<8x16xf32>
    %125 = arith.addf %119, %124 : vector<8x16xf32>
    %126 = arith.truncf %125 : vector<8x16xf32> to vector<8x16xbf16>
    %c6_42 = arith.constant 6 : index
    %c0_43 = arith.constant 0 : index
    %c0_44 = arith.constant 0 : index
    %127 = vector.load %arg2[%c6_42, %c0_43, %c0_44] : memref<14x16x16xbf16, #tpu.memory_space<vmem>>, vector<1x16x16xbf16>
    %128 = vector.shape_cast %127 : vector<1x16x16xbf16> to vector<16x16xbf16>
    %cst_45 = arith.constant dense<0.000000e+00> : vector<8x16xf32>
    %129 = tpu.matmul %126, %128, %cst_45 {dimension_numbers = #tpu.dot_dimension_numbers<[1], [0], [0], [1], [0, 0, 1, 1], [], []>} : vector<8x16xbf16>, vector<16x16xbf16>, vector<8x16xf32> -> vector<8x16xf32>
    %130 = arith.addf %112, %129 : vector<8x16xf32>
    %c7 = arith.constant 7 : index
    %c0_46 = arith.constant 0 : index
    %c0_47 = arith.constant 0 : index
    %131 = vector.load %arg4[%c7, %c0_46, %c0_47] : memref<14x8x2xf32, #tpu.memory_space<vmem>>, vector<1x8x2xf32>
    %132 = vector.shape_cast %131 : vector<1x8x2xf32> to vector<8x2xf32>
    %133 = vector.extract_strided_slice %132 {offsets = [0, 0], sizes = [8, 1], strides = [1, 1]} : vector<8x2xf32> to vector<8x1xf32>
    %134 = vector.extract_strided_slice %3 {offsets = [0, 0], sizes = [1, 16], strides = [1, 1]} : vector<2x16xf32> to vector<1x16xf32>
    %135 = vector.broadcast %133 : vector<8x1xf32> to vector<8x16xf32>
    %136 = vector.broadcast %134 : vector<1x16xf32> to vector<8x16xf32>
    %137 = arith.mulf %135, %136 : vector<8x16xf32>
    %138 = vector.extract_strided_slice %132 {offsets = [0, 1], sizes = [8, 1], strides = [1, 1]} : vector<8x2xf32> to vector<8x1xf32>
    %139 = vector.extract_strided_slice %3 {offsets = [1, 0], sizes = [1, 16], strides = [1, 1]} : vector<2x16xf32> to vector<1x16xf32>
    %140 = vector.broadcast %138 : vector<8x1xf32> to vector<8x16xf32>
    %141 = vector.broadcast %139 : vector<1x16xf32> to vector<8x16xf32>
    %142 = arith.mulf %140, %141 : vector<8x16xf32>
    %143 = arith.addf %137, %142 : vector<8x16xf32>
    %144 = arith.truncf %143 : vector<8x16xf32> to vector<8x16xbf16>
    %c7_48 = arith.constant 7 : index
    %c0_49 = arith.constant 0 : index
    %c0_50 = arith.constant 0 : index
    %145 = vector.load %arg2[%c7_48, %c0_49, %c0_50] : memref<14x16x16xbf16, #tpu.memory_space<vmem>>, vector<1x16x16xbf16>
    %146 = vector.shape_cast %145 : vector<1x16x16xbf16> to vector<16x16xbf16>
    %cst_51 = arith.constant dense<0.000000e+00> : vector<8x16xf32>
    %147 = tpu.matmul %144, %146, %cst_51 {dimension_numbers = #tpu.dot_dimension_numbers<[1], [0], [0], [1], [0, 0, 1, 1], [], []>} : vector<8x16xbf16>, vector<16x16xbf16>, vector<8x16xf32> -> vector<8x16xf32>
    %148 = arith.addf %130, %147 : vector<8x16xf32>
    %c8 = arith.constant 8 : index
    %c0_52 = arith.constant 0 : index
    %c0_53 = arith.constant 0 : index
    %149 = vector.load %arg4[%c8, %c0_52, %c0_53] : memref<14x8x2xf32, #tpu.memory_space<vmem>>, vector<1x8x2xf32>
    %150 = vector.shape_cast %149 : vector<1x8x2xf32> to vector<8x2xf32>
    %151 = vector.extract_strided_slice %150 {offsets = [0, 0], sizes = [8, 1], strides = [1, 1]} : vector<8x2xf32> to vector<8x1xf32>
    %152 = vector.extract_strided_slice %3 {offsets = [0, 0], sizes = [1, 16], strides = [1, 1]} : vector<2x16xf32> to vector<1x16xf32>
    %153 = vector.broadcast %151 : vector<8x1xf32> to vector<8x16xf32>
    %154 = vector.broadcast %152 : vector<1x16xf32> to vector<8x16xf32>
    %155 = arith.mulf %153, %154 : vector<8x16xf32>
    %156 = vector.extract_strided_slice %150 {offsets = [0, 1], sizes = [8, 1], strides = [1, 1]} : vector<8x2xf32> to vector<8x1xf32>
    %157 = vector.extract_strided_slice %3 {offsets = [1, 0], sizes = [1, 16], strides = [1, 1]} : vector<2x16xf32> to vector<1x16xf32>
    %158 = vector.broadcast %156 : vector<8x1xf32> to vector<8x16xf32>
    %159 = vector.broadcast %157 : vector<1x16xf32> to vector<8x16xf32>
    %160 = arith.mulf %158, %159 : vector<8x16xf32>
    %161 = arith.addf %155, %160 : vector<8x16xf32>
    %162 = arith.truncf %161 : vector<8x16xf32> to vector<8x16xbf16>
    %c8_54 = arith.constant 8 : index
    %c0_55 = arith.constant 0 : index
    %c0_56 = arith.constant 0 : index
    %163 = vector.load %arg2[%c8_54, %c0_55, %c0_56] : memref<14x16x16xbf16, #tpu.memory_space<vmem>>, vector<1x16x16xbf16>
    %164 = vector.shape_cast %163 : vector<1x16x16xbf16> to vector<16x16xbf16>
    %cst_57 = arith.constant dense<0.000000e+00> : vector<8x16xf32>
    %165 = tpu.matmul %162, %164, %cst_57 {dimension_numbers = #tpu.dot_dimension_numbers<[1], [0], [0], [1], [0, 0, 1, 1], [], []>} : vector<8x16xbf16>, vector<16x16xbf16>, vector<8x16xf32> -> vector<8x16xf32>
    %166 = arith.addf %148, %165 : vector<8x16xf32>
    %c9 = arith.constant 9 : index
    %c0_58 = arith.constant 0 : index
    %c0_59 = arith.constant 0 : index
    %167 = vector.load %arg4[%c9, %c0_58, %c0_59] : memref<14x8x2xf32, #tpu.memory_space<vmem>>, vector<1x8x2xf32>
    %168 = vector.shape_cast %167 : vector<1x8x2xf32> to vector<8x2xf32>
    %169 = vector.extract_strided_slice %168 {offsets = [0, 0], sizes = [8, 1], strides = [1, 1]} : vector<8x2xf32> to vector<8x1xf32>
    %170 = vector.extract_strided_slice %3 {offsets = [0, 0], sizes = [1, 16], strides = [1, 1]} : vector<2x16xf32> to vector<1x16xf32>
    %171 = vector.broadcast %169 : vector<8x1xf32> to vector<8x16xf32>
    %172 = vector.broadcast %170 : vector<1x16xf32> to vector<8x16xf32>
    %173 = arith.mulf %171, %172 : vector<8x16xf32>
    %174 = vector.extract_strided_slice %168 {offsets = [0, 1], sizes = [8, 1], strides = [1, 1]} : vector<8x2xf32> to vector<8x1xf32>
    %175 = vector.extract_strided_slice %3 {offsets = [1, 0], sizes = [1, 16], strides = [1, 1]} : vector<2x16xf32> to vector<1x16xf32>
    %176 = vector.broadcast %174 : vector<8x1xf32> to vector<8x16xf32>
    %177 = vector.broadcast %175 : vector<1x16xf32> to vector<8x16xf32>
    %178 = arith.mulf %176, %177 : vector<8x16xf32>
    %179 = arith.addf %173, %178 : vector<8x16xf32>
    %180 = arith.truncf %179 : vector<8x16xf32> to vector<8x16xbf16>
    %c9_60 = arith.constant 9 : index
    %c0_61 = arith.constant 0 : index
    %c0_62 = arith.constant 0 : index
    %181 = vector.load %arg2[%c9_60, %c0_61, %c0_62] : memref<14x16x16xbf16, #tpu.memory_space<vmem>>, vector<1x16x16xbf16>
    %182 = vector.shape_cast %181 : vector<1x16x16xbf16> to vector<16x16xbf16>
    %cst_63 = arith.constant dense<0.000000e+00> : vector<8x16xf32>
    %183 = tpu.matmul %180, %182, %cst_63 {dimension_numbers = #tpu.dot_dimension_numbers<[1], [0], [0], [1], [0, 0, 1, 1], [], []>} : vector<8x16xbf16>, vector<16x16xbf16>, vector<8x16xf32> -> vector<8x16xf32>
    %184 = arith.addf %166, %183 : vector<8x16xf32>
    %c10 = arith.constant 10 : index
    %c0_64 = arith.constant 0 : index
    %c0_65 = arith.constant 0 : index
    %185 = vector.load %arg4[%c10, %c0_64, %c0_65] : memref<14x8x2xf32, #tpu.memory_space<vmem>>, vector<1x8x2xf32>
    %186 = vector.shape_cast %185 : vector<1x8x2xf32> to vector<8x2xf32>
    %187 = vector.extract_strided_slice %186 {offsets = [0, 0], sizes = [8, 1], strides = [1, 1]} : vector<8x2xf32> to vector<8x1xf32>
    %188 = vector.extract_strided_slice %3 {offsets = [0, 0], sizes = [1, 16], strides = [1, 1]} : vector<2x16xf32> to vector<1x16xf32>
    %189 = vector.broadcast %187 : vector<8x1xf32> to vector<8x16xf32>
    %190 = vector.broadcast %188 : vector<1x16xf32> to vector<8x16xf32>
    %191 = arith.mulf %189, %190 : vector<8x16xf32>
    %192 = vector.extract_strided_slice %186 {offsets = [0, 1], sizes = [8, 1], strides = [1, 1]} : vector<8x2xf32> to vector<8x1xf32>
    %193 = vector.extract_strided_slice %3 {offsets = [1, 0], sizes = [1, 16], strides = [1, 1]} : vector<2x16xf32> to vector<1x16xf32>
    %194 = vector.broadcast %192 : vector<8x1xf32> to vector<8x16xf32>
    %195 = vector.broadcast %193 : vector<1x16xf32> to vector<8x16xf32>
    %196 = arith.mulf %194, %195 : vector<8x16xf32>
    %197 = arith.addf %191, %196 : vector<8x16xf32>
    %198 = arith.truncf %197 : vector<8x16xf32> to vector<8x16xbf16>
    %c10_66 = arith.constant 10 : index
    %c0_67 = arith.constant 0 : index
    %c0_68 = arith.constant 0 : index
    %199 = vector.load %arg2[%c10_66, %c0_67, %c0_68] : memref<14x16x16xbf16, #tpu.memory_space<vmem>>, vector<1x16x16xbf16>
    %200 = vector.shape_cast %199 : vector<1x16x16xbf16> to vector<16x16xbf16>
    %cst_69 = arith.constant dense<0.000000e+00> : vector<8x16xf32>
    %201 = tpu.matmul %198, %200, %cst_69 {dimension_numbers = #tpu.dot_dimension_numbers<[1], [0], [0], [1], [0, 0, 1, 1], [], []>} : vector<8x16xbf16>, vector<16x16xbf16>, vector<8x16xf32> -> vector<8x16xf32>
    %202 = arith.addf %184, %201 : vector<8x16xf32>
    %c11 = arith.constant 11 : index
    %c0_70 = arith.constant 0 : index
    %c0_71 = arith.constant 0 : index
    %203 = vector.load %arg4[%c11, %c0_70, %c0_71] : memref<14x8x2xf32, #tpu.memory_space<vmem>>, vector<1x8x2xf32>
    %204 = vector.shape_cast %203 : vector<1x8x2xf32> to vector<8x2xf32>
    %205 = vector.extract_strided_slice %204 {offsets = [0, 0], sizes = [8, 1], strides = [1, 1]} : vector<8x2xf32> to vector<8x1xf32>
    %206 = vector.extract_strided_slice %3 {offsets = [0, 0], sizes = [1, 16], strides = [1, 1]} : vector<2x16xf32> to vector<1x16xf32>
    %207 = vector.broadcast %205 : vector<8x1xf32> to vector<8x16xf32>
    %208 = vector.broadcast %206 : vector<1x16xf32> to vector<8x16xf32>
    %209 = arith.mulf %207, %208 : vector<8x16xf32>
    %210 = vector.extract_strided_slice %204 {offsets = [0, 1], sizes = [8, 1], strides = [1, 1]} : vector<8x2xf32> to vector<8x1xf32>
    %211 = vector.extract_strided_slice %3 {offsets = [1, 0], sizes = [1, 16], strides = [1, 1]} : vector<2x16xf32> to vector<1x16xf32>
    %212 = vector.broadcast %210 : vector<8x1xf32> to vector<8x16xf32>
    %213 = vector.broadcast %211 : vector<1x16xf32> to vector<8x16xf32>
    %214 = arith.mulf %212, %213 : vector<8x16xf32>
    %215 = arith.addf %209, %214 : vector<8x16xf32>
    %216 = arith.truncf %215 : vector<8x16xf32> to vector<8x16xbf16>
    %c11_72 = arith.constant 11 : index
    %c0_73 = arith.constant 0 : index
    %c0_74 = arith.constant 0 : index
    %217 = vector.load %arg2[%c11_72, %c0_73, %c0_74] : memref<14x16x16xbf16, #tpu.memory_space<vmem>>, vector<1x16x16xbf16>
    %218 = vector.shape_cast %217 : vector<1x16x16xbf16> to vector<16x16xbf16>
    %cst_75 = arith.constant dense<0.000000e+00> : vector<8x16xf32>
    %219 = tpu.matmul %216, %218, %cst_75 {dimension_numbers = #tpu.dot_dimension_numbers<[1], [0], [0], [1], [0, 0, 1, 1], [], []>} : vector<8x16xbf16>, vector<16x16xbf16>, vector<8x16xf32> -> vector<8x16xf32>
    %220 = arith.addf %202, %219 : vector<8x16xf32>
    %c12 = arith.constant 12 : index
    %c0_76 = arith.constant 0 : index
    %c0_77 = arith.constant 0 : index
    %221 = vector.load %arg4[%c12, %c0_76, %c0_77] : memref<14x8x2xf32, #tpu.memory_space<vmem>>, vector<1x8x2xf32>
    %222 = vector.shape_cast %221 : vector<1x8x2xf32> to vector<8x2xf32>
    %223 = vector.extract_strided_slice %222 {offsets = [0, 0], sizes = [8, 1], strides = [1, 1]} : vector<8x2xf32> to vector<8x1xf32>
    %224 = vector.extract_strided_slice %3 {offsets = [0, 0], sizes = [1, 16], strides = [1, 1]} : vector<2x16xf32> to vector<1x16xf32>
    %225 = vector.broadcast %223 : vector<8x1xf32> to vector<8x16xf32>
    %226 = vector.broadcast %224 : vector<1x16xf32> to vector<8x16xf32>
    %227 = arith.mulf %225, %226 : vector<8x16xf32>
    %228 = vector.extract_strided_slice %222 {offsets = [0, 1], sizes = [8, 1], strides = [1, 1]} : vector<8x2xf32> to vector<8x1xf32>
    %229 = vector.extract_strided_slice %3 {offsets = [1, 0], sizes = [1, 16], strides = [1, 1]} : vector<2x16xf32> to vector<1x16xf32>
    %230 = vector.broadcast %228 : vector<8x1xf32> to vector<8x16xf32>
    %231 = vector.broadcast %229 : vector<1x16xf32> to vector<8x16xf32>
    %232 = arith.mulf %230, %231 : vector<8x16xf32>
    %233 = arith.addf %227, %232 : vector<8x16xf32>
    %234 = arith.truncf %233 : vector<8x16xf32> to vector<8x16xbf16>
    %c12_78 = arith.constant 12 : index
    %c0_79 = arith.constant 0 : index
    %c0_80 = arith.constant 0 : index
    %235 = vector.load %arg2[%c12_78, %c0_79, %c0_80] : memref<14x16x16xbf16, #tpu.memory_space<vmem>>, vector<1x16x16xbf16>
    %236 = vector.shape_cast %235 : vector<1x16x16xbf16> to vector<16x16xbf16>
    %cst_81 = arith.constant dense<0.000000e+00> : vector<8x16xf32>
    %237 = tpu.matmul %234, %236, %cst_81 {dimension_numbers = #tpu.dot_dimension_numbers<[1], [0], [0], [1], [0, 0, 1, 1], [], []>} : vector<8x16xbf16>, vector<16x16xbf16>, vector<8x16xf32> -> vector<8x16xf32>
    %238 = arith.addf %220, %237 : vector<8x16xf32>
    %c13 = arith.constant 13 : index
    %c0_82 = arith.constant 0 : index
    %c0_83 = arith.constant 0 : index
    %239 = vector.load %arg4[%c13, %c0_82, %c0_83] : memref<14x8x2xf32, #tpu.memory_space<vmem>>, vector<1x8x2xf32>
    %240 = vector.shape_cast %239 : vector<1x8x2xf32> to vector<8x2xf32>
    %241 = vector.extract_strided_slice %240 {offsets = [0, 0], sizes = [8, 1], strides = [1, 1]} : vector<8x2xf32> to vector<8x1xf32>
    %242 = vector.extract_strided_slice %3 {offsets = [0, 0], sizes = [1, 16], strides = [1, 1]} : vector<2x16xf32> to vector<1x16xf32>
    %243 = vector.broadcast %241 : vector<8x1xf32> to vector<8x16xf32>
    %244 = vector.broadcast %242 : vector<1x16xf32> to vector<8x16xf32>
    %245 = arith.mulf %243, %244 : vector<8x16xf32>
    %246 = vector.extract_strided_slice %240 {offsets = [0, 1], sizes = [8, 1], strides = [1, 1]} : vector<8x2xf32> to vector<8x1xf32>
    %247 = vector.extract_strided_slice %3 {offsets = [1, 0], sizes = [1, 16], strides = [1, 1]} : vector<2x16xf32> to vector<1x16xf32>
    %248 = vector.broadcast %246 : vector<8x1xf32> to vector<8x16xf32>
    %249 = vector.broadcast %247 : vector<1x16xf32> to vector<8x16xf32>
    %250 = arith.mulf %248, %249 : vector<8x16xf32>
    %251 = arith.addf %245, %250 : vector<8x16xf32>
    %252 = arith.truncf %251 : vector<8x16xf32> to vector<8x16xbf16>
    %c13_84 = arith.constant 13 : index
    %c0_85 = arith.constant 0 : index
    %c0_86 = arith.constant 0 : index
    %253 = vector.load %arg2[%c13_84, %c0_85, %c0_86] : memref<14x16x16xbf16, #tpu.memory_space<vmem>>, vector<1x16x16xbf16>
    %254 = vector.shape_cast %253 : vector<1x16x16xbf16> to vector<16x16xbf16>
    %cst_87 = arith.constant dense<0.000000e+00> : vector<8x16xf32>
    %255 = tpu.matmul %252, %254, %cst_87 {dimension_numbers = #tpu.dot_dimension_numbers<[1], [0], [0], [1], [0, 0, 1, 1], [], []>} : vector<8x16xbf16>, vector<16x16xbf16>, vector<8x16xf32> -> vector<8x16xf32>
    %256 = arith.addf %238, %255 : vector<8x16xf32>
    %c0_88 = arith.constant 0 : index
    %c0_89 = arith.constant 0 : index
    %257 = vector.load %arg6[%c0_88, %c0_89] : memref<8x16xf32, #tpu.memory_space<vmem>>, vector<8x16xf32>
    tpu.vector_store %arg6[%c0_88, %c0_89], %256 {strides = array<i32>} : memref<8x16xf32, #tpu.memory_space<vmem>>, vector<8x16xf32>,
    %c1_i32 = arith.constant 1 : i32
    %258 = arith.cmpi eq, %arg1, %c1_i32 : i32
    %259 = arith.extui %258 : i1 to i32
    %c0_i32_90 = arith.constant 0 : i32
    %260 = arith.cmpi ne, %259, %c0_i32_90 : i32
    scf.if %260 {
      %c0_91 = arith.constant 0 : index
      %c0_92 = arith.constant 0 : index
      %261 = vector.load %arg6[%c0_91, %c0_92] : memref<8x16xf32, #tpu.memory_space<vmem>>, vector<8x16xf32>
      %c0_93 = arith.constant 0 : index
      %c0_94 = arith.constant 0 : index
      %262 = vector.load %arg5[%c0_93, %c0_94] : memref<8x1xf32, #tpu.memory_space<vmem>>, vector<8x1xf32>
      %263 = vector.broadcast %262 : vector<8x1xf32> to vector<8x16xf32>
      %264 = arith.addf %261, %263 : vector<8x16xf32>
      %cst_95 = arith.constant 0.000000e+00 : f32
      %265 = vector.broadcast %cst_95 : f32 to vector<8x16xf32>
      %266 = arith.maximumf %264, %265 : vector<8x16xf32>
      %c0_96 = arith.constant 0 : index
      %c0_97 = arith.constant 0 : index
      %267 = vector.load %arg6[%c0_96, %c0_97] : memref<8x16xf32, #tpu.memory_space<vmem>>, vector<8x16xf32>
      tpu.vector_store %arg6[%c0_96, %c0_97], %266 {strides = array<i32>} : memref<8x16xf32, #tpu.memory_space<vmem>>, vector<8x16xf32>,
    } else {
    }
    return
  }
  func.func @transform_0(%arg0: i32, %arg1: i32) -> (i32, i32, i32) {
    %c0_i32 = arith.constant 0 : i32
    %c0_i32_0 = arith.constant 0 : i32
    return %arg1, %c0_i32, %arg0 : i32, i32, i32
  }
  func.func @transform_1(%arg0: i32, %arg1: i32) -> (i32, i32) {
    %c0_i32 = arith.constant 0 : i32
    %c0_i32_0 = arith.constant 0 : i32
    %c0_i32_1 = arith.constant 0 : i32
    return %c0_i32, %c0_i32_0 : i32, i32
  }
  func.func @transform_2(%arg0: i32, %arg1: i32) -> (i32, i32, i32) {
    %c0_i32 = arith.constant 0 : i32
    %c0_i32_0 = arith.constant 0 : i32
    %c0_i32_1 = arith.constant 0 : i32
    return %arg1, %c0_i32, %c0_i32_0 : i32, i32, i32
  }
  func.func @transform_3(%arg0: i32, %arg1: i32) -> (i32, i32) {
    %c0_i32 = arith.constant 0 : i32
    %c0_i32_0 = arith.constant 0 : i32
    %c0_i32_1 = arith.constant 0 : i32
    return %c0_i32, %c0_i32_0 : i32, i32
  }
  func.func @transform_4(%arg0: i32, %arg1: i32) -> (i32, i32) {
    %c0_i32 = arith.constant 0 : i32
    %c0_i32_0 = arith.constant 0 : i32
    return %c0_i32, %arg0 : i32, i32
  }
}

module attributes {stable_mosaic.version = 11 : i64} {
  func.func @epilogue_kernel(%arg0: memref<8x16xf32, #tpu.memory_space<vmem>>, %arg1: memref<16x16xbf16, #tpu.memory_space<vmem>>, %arg2: memref<16x1xf32, #tpu.memory_space<vmem>>, %arg3: memref<16x1xf32, #tpu.memory_space<vmem>>, %arg4: memref<16x1xf32, #tpu.memory_space<vmem>>, %arg5: memref<8x1xf32, #tpu.memory_space<vmem>>, %arg6: memref<1x1xf32, #tpu.memory_space<smem>>, %arg7: memref<8x128xf32, #tpu.memory_space<vmem>>, %arg8: memref<1x128xf32, #tpu.memory_space<vmem>>, %arg9: memref<128x1xf32, #tpu.memory_space<vmem>>, %arg10: memref<1x1xf32, #tpu.memory_space<smem>>, %arg11: memref<2x1xf32, #tpu.memory_space<vmem>>) attributes {dimension_semantics = [], scalar_prefetch = 0 : i64, scratch_operands = 0 : i64, tpu.core_type = #tpu.core_type<tc>} {
    %c0 = arith.constant 0 : index
    %c0_0 = arith.constant 0 : index
    %0 = vector.load %arg0[%c0, %c0_0] : memref<8x16xf32, #tpu.memory_space<vmem>>, vector<8x16xf32>
    %1 = tpu.transpose %0, [1, 0] : vector<8x16xf32> -> vector<16x8xf32>
    %c0_1 = arith.constant 0 : index
    %c0_2 = arith.constant 0 : index
    %2 = vector.load %arg1[%c0_1, %c0_2] : memref<16x16xbf16, #tpu.memory_space<vmem>>, vector<16x16xbf16>
    %c0_3 = arith.constant 0 : index
    %c0_4 = arith.constant 0 : index
    %3 = vector.load %arg2[%c0_3, %c0_4] : memref<16x1xf32, #tpu.memory_space<vmem>>, vector<16x1xf32>
    %c0_5 = arith.constant 0 : index
    %c0_6 = arith.constant 0 : index
    %4 = vector.load %arg3[%c0_5, %c0_6] : memref<16x1xf32, #tpu.memory_space<vmem>>, vector<16x1xf32>
    %c0_7 = arith.constant 0 : index
    %c0_8 = arith.constant 0 : index
    %5 = vector.load %arg5[%c0_7, %c0_8] : memref<8x1xf32, #tpu.memory_space<vmem>>, vector<8x1xf32>
    %cst = arith.constant dense<0.000000e+00> : vector<16x1xf32>
    %6 = tpu.matmul %1, %5, %cst {dimension_numbers = #tpu.dot_dimension_numbers<[1], [0], [0], [1], [0, 0, 1, 1], [], []>} : vector<16x8xf32>, vector<8x1xf32>, vector<16x1xf32> -> vector<16x1xf32>
    %7 = arith.mulf %4, %6 : vector<16x1xf32>
    %8 = arith.truncf %7 : vector<16x1xf32> to vector<16x1xbf16>
    %cst_9 = arith.constant dense<0.000000e+00> : vector<16x1xf32>
    %9 = tpu.matmul %2, %8, %cst_9 {dimension_numbers = #tpu.dot_dimension_numbers<[1], [0], [0], [1], [0, 0, 1, 1], [], []>} : vector<16x16xbf16>, vector<16x1xbf16>, vector<16x1xf32> -> vector<16x1xf32>
    %10 = arith.mulf %3, %9 : vector<16x1xf32>
    %c0_10 = arith.constant 0 : index
    %c0_11 = arith.constant 0 : index
    %11 = memref.load %arg6[%c0_10, %c0_11] : memref<1x1xf32, #tpu.memory_space<smem>>
    %12 = vector.broadcast %11 : f32 to vector<16x1xf32>
    %13 = arith.addf %10, %12 : vector<16x1xf32>
    %14 = math.tanh %13 : vector<16x1xf32>
    %15 = vector.broadcast %14 : vector<16x1xf32> to vector<16x8xf32>
    %16 = arith.mulf %1, %15 : vector<16x8xf32>
    %c0_12 = arith.constant 0 : index
    %c0_13 = arith.constant 0 : index
    %17 = vector.load %arg7[%c0_12, %c0_13] : memref<8x128xf32, #tpu.memory_space<vmem>>, vector<8x128xf32>
    %cst_14 = arith.constant dense<0.000000e+00> : vector<16x128xf32>
    %18 = tpu.matmul %16, %17, %cst_14 {dimension_numbers = #tpu.dot_dimension_numbers<[1], [0], [0], [1], [0, 0, 1, 1], [], []>} : vector<16x8xf32>, vector<8x128xf32>, vector<16x128xf32> -> vector<16x128xf32>
    %19 = vector.broadcast %4 : vector<16x1xf32> to vector<16x128xf32>
    %20 = arith.mulf %19, %18 : vector<16x128xf32>
    %21 = arith.truncf %20 : vector<16x128xf32> to vector<16x128xbf16>
    %cst_15 = arith.constant dense<0.000000e+00> : vector<16x128xf32>
    %22 = tpu.matmul %2, %21, %cst_15 {dimension_numbers = #tpu.dot_dimension_numbers<[1], [0], [0], [1], [0, 0, 1, 1], [], []>} : vector<16x16xbf16>, vector<16x128xbf16>, vector<16x128xf32> -> vector<16x128xf32>
    %23 = vector.broadcast %3 : vector<16x1xf32> to vector<16x128xf32>
    %24 = arith.mulf %23, %22 : vector<16x128xf32>
    %c0_16 = arith.constant 0 : index
    %c0_17 = arith.constant 0 : index
    %25 = vector.load %arg8[%c0_16, %c0_17] : memref<1x128xf32, #tpu.memory_space<vmem>>, vector<1x128xf32>
    %26 = vector.broadcast %25 : vector<1x128xf32> to vector<16x128xf32>
    %27 = arith.addf %24, %26 : vector<16x128xf32>
    %c0_18 = arith.constant 0 : index
    %c0_19 = arith.constant 0 : index
    %28 = vector.load %arg4[%c0_18, %c0_19] : memref<16x1xf32, #tpu.memory_space<vmem>>, vector<16x1xf32>
    %cst_20 = arith.constant 0.000000e+00 : f32
    %29 = vector.broadcast %cst_20 : f32 to vector<16x1xf32>
    %30 = arith.cmpf ogt, %28, %29 : vector<16x1xf32>
    %cst_21 = arith.constant -3.40282347E+38 : f32
    %31 = vector.shape_cast %30 : vector<16x1xi1> to vector<16x1xi1>
    %32 = vector.broadcast %31 : vector<16x1xi1> to vector<16x128xi1>
    %33 = vector.broadcast %cst_21 : f32 to vector<16x128xf32>
    %34 = arith.select %32, %27, %33 : vector<16x128xi1>, vector<16x128xf32>
    %35 = vector.shape_cast %34 : vector<16x128xf32> to vector<2x8x128xf32>
    %cst_22 = arith.constant dense<0xFF800000> : vector<2x128xf32>
    %36 = vector.multi_reduction <maximumf>, %35, %cst_22 [1] : vector<2x8x128xf32> to vector<2x128xf32>
    %c0_23 = arith.constant 0 : index
    %c0_24 = arith.constant 0 : index
    %37 = vector.load %arg9[%c0_23, %c0_24] : memref<128x1xf32, #tpu.memory_space<vmem>>, vector<128x1xf32>
    %cst_25 = arith.constant dense<0.000000e+00> : vector<2x1xf32>
    %38 = tpu.matmul %36, %37, %cst_25 {dimension_numbers = #tpu.dot_dimension_numbers<[1], [0], [0], [1], [0, 0, 1, 1], [], []>} : vector<2x128xf32>, vector<128x1xf32>, vector<2x1xf32> -> vector<2x1xf32>
    %c0_26 = arith.constant 0 : index
    %c0_27 = arith.constant 0 : index
    %39 = memref.load %arg10[%c0_26, %c0_27] : memref<1x1xf32, #tpu.memory_space<smem>>
    %40 = vector.broadcast %39 : f32 to vector<2x1xf32>
    %41 = arith.addf %38, %40 : vector<2x1xf32>
    %42 = arith.negf %41 : vector<2x1xf32>
    %43 = math.exp %42 : vector<2x1xf32>
    %cst_28 = arith.constant 1.000000e+00 : f32
    %44 = vector.broadcast %cst_28 : f32 to vector<2x1xf32>
    %45 = arith.addf %44, %43 : vector<2x1xf32>
    %46 = arith.divf %44, %45 : vector<2x1xf32>
    %c0_29 = arith.constant 0 : index
    %c0_30 = arith.constant 0 : index
    %47 = vector.load %arg11[%c0_29, %c0_30] : memref<2x1xf32, #tpu.memory_space<vmem>>, vector<2x1xf32>
    tpu.vector_store %arg11[%c0_29, %c0_30], %46 {strides = array<i32>} : memref<2x1xf32, #tpu.memory_space<vmem>>, vector<2x1xf32>,
    return
  }
}

</mosaic_0001>

<llo_original>
// kernel: mynet_forward.3
$region0: #{mynet_forward.3}
  #allocation0 [shape = 'u32[]', space=smem, size = 0x4, offset = 0x4, fixed_abs, tag = 'smem constant byte address 0x4 - core index']
  #allocation1 [shape = 'u32[144,128]{1,0:T(1,128)}', space=vmem, size = 0x12000, scoped, tag = 'internal scratch']
  #allocation2 [shape = 'f32[1,1]{1,0:T(1,128)S(6)}', space=smem, size = 0x200, scoped, tag = 'scoped memory for mynet_forward.3']
  #allocation3 [shape = 'f32[1,1]{1,0:T(1,128)S(6)}', space=smem, size = 0x200, scoped, tag = 'scoped memory for mynet_forward.3']
  %s0 = inlined_call_operand.vmem [shape: f32[8,16], index: 0, kind: input, shape index: {}]
  %s1 = inlined_call_operand.vmem [shape: bf16[16,16], index: 1, kind: input, shape index: {}]
  %s2 = inlined_call_operand.vmem [shape: f32[16,1], index: 2, kind: input, shape index: {}]
  %s3 = inlined_call_operand.vmem [shape: f32[16,1], index: 3, kind: input, shape index: {}]
  %s4 = inlined_call_operand.vmem [shape: f32[16,1], index: 4, kind: input, shape index: {}]
  %s5 = inlined_call_operand.vmem [shape: f32[8,1], index: 5, kind: input, shape index: {}]
  %s6 = inlined_call_operand.<no memory space> [shape: f32[1,1], index: 6, kind: input, shape index: {}]
  %s7 = inlined_call_operand.vmem [shape: f32[8,128], index: 7, kind: input, shape index: {}]
  %s8 = inlined_call_operand.vmem [shape: f32[1,128], index: 8, kind: input, shape index: {}]
  %s9 = inlined_call_operand.vmem [shape: f32[128,1], index: 9, kind: input, shape index: {}]
  %s10 = inlined_call_operand.<no memory space> [shape: f32[1,1], index: 10, kind: input, shape index: {}]
  %s11 = inlined_call_operand.vmem [shape: f32[2,1], index: 11, kind: output, shape index: {}]
  %s12 = sld [smem:[#allocation0]]
  $region54: #{mynet_forward.3} parent=0
    _
  %s14 = ssub.s32 1, %s12
  %s15 = scalar_select 0, %s14, %s12
  %16 = sst [smem:[#allocation2]] %s6
  %17 = sst [smem:[#allocation3]] %s10
  // Predicated region
  $region2: #{mynet_forward.3} parent=0 // pred_check
    _
  $region3: #{mynet_forward.3} parent=0 // pred_check_branch
    %19 = sbr.rel (0) target = $region5
  $region4: #{mynet_forward.3} parent=0 // pred_region
    _
  $region5: #{mynet_forward.3} parent=0 // pred_fallthru
    _
  // Predicated region
  $region6: #{mynet_forward.3} parent=0 // pred_check
    _
  $region7: #{mynet_forward.3} parent=0 // pred_check_branch
    %21 = sbr.rel (0) target = $region9
  $region8: #{mynet_forward.3} parent=0 // pred_region
    _
  $region9: #{mynet_forward.3} parent=0 // pred_fallthru
    _
  // Predicated region
  $region10: #{mynet_forward.3} parent=0 // pred_check
    _
  $region11: #{mynet_forward.3} parent=0 // pred_check_branch
    %23 = sbr.rel (0) target = $region13
  $region12: #{mynet_forward.3} parent=0 // pred_region
    _
  $region13: #{mynet_forward.3} parent=0 // pred_fallthru
    _
  // Predicated region
  $region14: #{mynet_forward.3} parent=0 // pred_check
    _
  $region15: #{mynet_forward.3} parent=0 // pred_check_branch
    %25 = sbr.rel (0) target = $region17
  $region16: #{mynet_forward.3} parent=0 // pred_region
    _
  $region17: #{mynet_forward.3} parent=0 // pred_fallthru
    _
  // Predicated region
  $region18: #{mynet_forward.3} parent=0 // pred_check
    _
  $region19: #{mynet_forward.3} parent=0 // pred_check_branch
    %27 = sbr.rel (0) target = $region21
  $region20: #{mynet_forward.3} parent=0 // pred_region
    _
  $region21: #{mynet_forward.3} parent=0 // pred_fallthru
    _
  // Predicated region
  $region22: #{mynet_forward.3} parent=0 // pred_check
    _
  $region23: #{mynet_forward.3} parent=0 // pred_check_branch
    %29 = sbr.rel (0) target = $region25
  $region24: #{mynet_forward.3} parent=0 // pred_region
    _
  $region25: #{mynet_forward.3} parent=0 // pred_fallthru
    _
  // Predicated region
  $region26: #{mynet_forward.3} parent=0 // pred_check
    _
  $region27: #{mynet_forward.3} parent=0 // pred_check_branch
    %31 = sbr.rel (0) target = $region29
  $region28: #{mynet_forward.3} parent=0 // pred_region
    _
  $region29: #{mynet_forward.3} parent=0 // pred_fallthru
    _
  // Predicated region
  $region30: #{mynet_forward.3} parent=0 // pred_check
    _
  $region31: #{mynet_forward.3} parent=0 // pred_check_branch
    %33 = sbr.rel (0) target = $region33
  $region32: #{mynet_forward.3} parent=0 // pred_region
    _
  $region33: #{mynet_forward.3} parent=0 // pred_fallthru
    _
  // Predicated region
  $region34: #{mynet_forward.3} parent=0 // pred_check
    _
  $region35: #{mynet_forward.3} parent=0 // pred_check_branch
    %35 = sbr.rel (0) target = $region37
  $region36: #{mynet_forward.3} parent=0 // pred_region
    _
  $region37: #{mynet_forward.3} parent=0 // pred_fallthru
    _
  // Predicated region
  $region38: #{mynet_forward.3} parent=0 // pred_check
    _
  $region39: #{mynet_forward.3} parent=0 // pred_check_branch
    %37 = sbr.rel (0) target = $region41
  $region40: #{mynet_forward.3} parent=0 // pred_region
    _
  $region41: #{mynet_forward.3} parent=0 // pred_fallthru
    _
  // Predicated region
  $region42: #{mynet_forward.3} parent=0 // pred_check
    _
  $region43: #{mynet_forward.3} parent=0 // pred_check_branch
    %39 = sbr.rel (0) target = $region45
  $region44: #{mynet_forward.3} parent=0 // pred_region
    _
  $region45: #{mynet_forward.3} parent=0 // pred_fallthru
    _
  %v41 = vld [vmem:[%s0] sm:$0xff]
  %42 = vxpose.xlu0.b32.start [1/16] %v41, 128
  %43 = vxpose.xlu0.b32.cont [2/16] 0.0, 128
  %44 = vxpose.xlu0.b32.cont [3/16] 0.0, 128
  %45 = vxpose.xlu0.b32.cont [4/16] 0.0, 128
  %46 = vxpose.xlu0.b32.cont [5/16] 0.0, 128
  %47 = vxpose.xlu0.b32.cont [6/16] 0.0, 128
  %48 = vxpose.xlu0.b32.cont [7/16] 0.0, 128
  %49 = vxpose.xlu0.b32.cont [8/16] 0.0, 128
  %50 = vxpose.xlu0.b32.cont [9/16] 0.0, 128
  %51 = vxpose.xlu0.b32.cont [10/16] 0.0, 128
  %52 = vxpose.xlu0.b32.cont [11/16] 0.0, 128
  %53 = vxpose.xlu0.b32.cont [12/16] 0.0, 128
  %54 = vxpose.xlu0.b32.cont [13/16] 0.0, 128
  %55 = vxpose.xlu0.b32.cont [14/16] 0.0, 128
  %56 = vxpose.xlu0.b32.cont [15/16] 0.0, 128
  %57 = vxpose.xlu0.b32.end [16/16] 0.0, 128
  %v58 = vpop.trf.xlu0
  %v59 = vpop.trf.xlu0
  %v60 = vpop.trf.xlu0
  %v61 = vpop.trf.xlu0
  %v62 = vpop.trf.xlu0
  %v63 = vpop.trf.xlu0
  %v64 = vpop.trf.xlu0
  %v65 = vpop.trf.xlu0
  %v66 = vpop.trf.xlu0
  %v67 = vpop.trf.xlu0
  %v68 = vpop.trf.xlu0
  %v69 = vpop.trf.xlu0
  %v70 = vpop.trf.xlu0
  %v71 = vpop.trf.xlu0
  %v72 = vpop.trf.xlu0
  %v73 = vpop.trf.xlu0
  %v74 = vld [vmem:[%s1] sm:$0xf]
  %v75 = vld [vmem:[%s1 + $0x4] sm:$0xf]
  %v76 = vld [vmem:[%s2] sm:$0xff]
  %v77 = vld [vmem:[%s2 + $0x8] sm:$0xff]
  %v78 = vld [vmem:[%s3] sm:$0xff]
  %v79 = vld [vmem:[%s3 + $0x8] sm:$0xff]
  %v80 = vld [vmem:[%s5] sm:$0xff]
  %vm81 = vcmask 64512
  %v83 = vsel %vm81, %v58, 0
  %v86 = vsel %vm81, %v59, 0
  %88 = vmatprep.subr.mxu0 0.0
  %89 = vmatpush1.msra.mxu0 %v80
  %90 = vmatprep.subr.mxu0 0.0
  %91 = vmatpush1.msra.mxu0 0.0
  %92 = vmatprep.subr.mxu0 0.0
  %93 = vmatpush1.msra.mxu0 0.0
  %94 = vmatprep.subr.mxu0 0.0
  %95 = vmatpush1.msra.mxu0 0.0
  %96 = vmatprep.subr.mxu0 0.0
  %97 = vmatpush1.msra.mxu0 0.0
  %98 = vmatprep.subr.mxu0 0.0
  %99 = vmatpush1.msra.mxu0 0.0
  %100 = vmatprep.subr.mxu0 0.0
  %101 = vmatpush1.msra.mxu0 0.0
  %102 = vmatprep.subr.mxu0 0.0
  %103 = vmatpush1.msra.mxu0 0.0
  %104 = vmatprep.subr.mxu0 0.0
  %105 = vmatpush1.msra.mxu0 0.0
  %106 = vmatprep.subr.mxu0 0.0
  %107 = vmatpush1.msra.mxu0 0.0
  %108 = vmatprep.subr.mxu0 0.0
  %109 = vmatpush1.msra.mxu0 0.0
  %110 = vmatprep.subr.mxu0 0.0
  %111 = vmatpush1.msra.mxu0 0.0
  %112 = vmatprep.subr.mxu0 0.0
  %113 = vmatpush1.msra.mxu0 0.0
  %114 = vmatprep.subr.mxu0 0.0
  %115 = vmatpush1.msra.mxu0 0.0
  %116 = vmatprep.subr.mxu0 0.0
  %117 = vmatpush1.msra.mxu0 0.0
  %118 = vmatprep.subr.mxu0 0.0
  %119 = vmatpush1.msra.mxu0 0.0
  %120 = vmatprep.subr.mxu0 0.0
  %121 = vmatpush1.msra.mxu0 0.0
  %122 = vmatprep.subr.mxu0 0.0
  %123 = vmatpush1.msra.mxu0 0.0
  %124 = vmatprep.subr.mxu0 0.0
  %125 = vmatpush1.msra.mxu0 0.0
  %126 = vmatprep.subr.mxu0 0.0
  %127 = vmatpush1.msra.mxu0 0.0
  %128 = vmatprep.subr.mxu0 0.0
  %129 = vmatpush1.msra.mxu0 0.0
  %130 = vmatprep.subr.mxu0 0.0
  %131 = vmatpush1.msra.mxu0 0.0
  %132 = vmatprep.subr.mxu0 0.0
  %133 = vmatpush1.msra.mxu0 0.0
  %134 = vmatprep.subr.mxu0 0.0
  %135 = vmatpush1.msra.mxu0 0.0
  %136 = vmatprep.subr.mxu0 0.0
  %137 = vmatpush1.msra.mxu0 0.0
  %138 = vmatprep.subr.mxu0 0.0
  %139 = vmatpush1.msra.mxu0 0.0
  %140 = vmatprep.subr.mxu0 0.0
  %141 = vmatpush1.msra.mxu0 0.0
  %142 = vmatprep.subr.mxu0 0.0
  %143 = vmatpush1.msra.mxu0 0.0
  %144 = vmatprep.subr.mxu0 0.0
  %145 = vmatpush1.msra.mxu0 0.0
  %146 = vmatprep.subr.mxu0 0.0
  %147 = vmatpush1.msra.mxu0 0.0
  %148 = vmatprep.subr.mxu0 0.0
  %149 = vmatpush1.msra.mxu0 0.0
  %150 = vmatprep.subr.mxu0 0.0
  %151 = vmatpush1.msra.mxu0 0.0
  %152 = vmatprep.mubr.f32.mxu0 0.0
  %153 = vmatmul.mubr.f32.gmra.mrb[0].mxu0 %v83
  %v154 = vpop.f32.mrb[0].mxu0
  %v155 = vadd.f32 0.0, %v154
  %v156 = vpop.f32.mrb[0].mxu0
  %157 = vmatprep.mubr.f32.mxu0 0.0
  %158 = vmatmul.mubr.f32.gmra.mrb[0].mxu0 %v86
  %v159 = vpop.f32.mrb[0].mxu0
  %v160 = vadd.f32 0.0, %v159
  %v161 = vpop.f32.mrb[0].mxu0
  %162 = vdwg.mxu0
  %v163 = vmul.f32 %v78, %v155
  %v164 = vmul.f32 %v79, %v160
  %v165 = vpack.c.bf16 %v164, %v163
  %v168 = vunpack.c.l.b16 %v74
  %v169 = vunpack.c.l.b16 %v75
  %v170 = vpack.c.b16 %v169, %v168
  %vm171 = vcmask 130048
  %v173 = vsel %vm171, %v170, 0
  %175 = vmatprep.subr.bf16.mxu0 0
  %176 = vmatpush1.bf16.msra.mxu0 %v165
  %177 = vmatprep.subr.bf16.mxu0 0
  %178 = vmatpush1.bf16.msra.mxu0 0
  %179 = vmatprep.subr.bf16.mxu0 0
  %180 = vmatpush1.bf16.msra.mxu0 0
  %181 = vmatprep.subr.bf16.mxu0 0
  %182 = vmatpush1.bf16.msra.mxu0 0
  %183 = vmatprep.subr.bf16.mxu0 0
  %184 = vmatpush1.bf16.msra.mxu0 0
  %185 = vmatprep.subr.bf16.mxu0 0
  %186 = vmatpush1.bf16.msra.mxu0 0
  %187 = vmatprep.subr.bf16.mxu0 0
  %188 = vmatpush1.bf16.msra.mxu0 0
  %189 = vmatprep.subr.bf16.mxu0 0
  %190 = vmatpush1.bf16.msra.mxu0 0
  %191 = vmatprep.subr.bf16.mxu0 0
  %192 = vmatpush1.bf16.msra.mxu0 0
  %193 = vmatprep.subr.bf16.mxu0 0
  %194 = vmatpush1.bf16.msra.mxu0 0
  %195 = vmatprep.subr.bf16.mxu0 0
  %196 = vmatpush1.bf16.msra.mxu0 0
  %197 = vmatprep.subr.bf16.mxu0 0
  %198 = vmatpush1.bf16.msra.mxu0 0
  %199 = vmatprep.subr.bf16.mxu0 0
  %200 = vmatpush1.bf16.msra.mxu0 0
  %201 = vmatprep.subr.bf16.mxu0 0
  %202 = vmatpush1.bf16.msra.mxu0 0
  %203 = vmatprep.subr.bf16.mxu0 0
  %204 = vmatpush1.bf16.msra.mxu0 0
  %205 = vmatprep.subr.bf16.mxu0 0
  %206 = vmatpush1.bf16.msra.mxu0 0
  %207 = vmatprep.mubr.bf16.mxu0 0
  %208 = vmatmul.mubr.bf16.gmra.mrb[0].mxu0 %v173
  %v209 = vpop.f32.mrb[0].mxu0
  %v210 = vadd.f32 0.0, %v209
  %v211 = vpop.f32.mrb[0].mxu0
  %v212 = vpop.f32.mrb[0].mxu0
  %v213 = vadd.f32 0.0, %v212
  %v214 = vpop.f32.mrb[0].mxu0
  %215 = vdwg.mxu0
  %v216 = vmul.f32 %v76, %v210
  %v217 = vmul.f32 %v77, %v213
  %s218 = sld [smem:[#allocation2]]
  %v219 = vstv %s218
  %v220 = vadd.f32 %v216, %v219
  %v221 = vadd.f32 %v217, %v219
  %v222 = vtanh.pop %v220
  %v223 = vtanh.pop %v221
  %225 = vset.pattern.permute.xlu0 0
  %226 = vperm.xlu0 %225, %v222
  %v227 = vpop.permute.xlu0 %226
  %230 = vset.pattern.permute.xlu0 0
  %231 = vperm.xlu0 %230, %v223
  %v232 = vpop.permute.xlu0 %231
  %v234 = vmul.f32 %v58, %v227
  %v235 = vmul.f32 %v59, %v232
  %v236 = vld [vmem:[%s7] sm:$0xff]
  %v238 = vsel %vm81, %v234, 0
  %v241 = vsel %vm81, %v235, 0
  %243 = vmatprep.subr.mxu0 0.0
  %244 = vmatpush1.msra.mxu0 %v236
  %245 = vmatprep.subr.mxu0 0.0
  %246 = vmatpush1.msra.mxu0 0.0
  %247 = vmatprep.subr.mxu0 0.0
  %248 = vmatpush1.msra.mxu0 0.0
  %249 = vmatprep.subr.mxu0 0.0
  %250 = vmatpush1.msra.mxu0 0.0
  %251 = vmatprep.subr.mxu0 0.0
  %252 = vmatpush1.msra.mxu0 0.0
  %253 = vmatprep.subr.mxu0 0.0
  %254 = vmatpush1.msra.mxu0 0.0
  %255 = vmatprep.subr.mxu0 0.0
  %256 = vmatpush1.msra.mxu0 0.0
  %257 = vmatprep.subr.mxu0 0.0
  %258 = vmatpush1.msra.mxu0 0.0
  %259 = vmatprep.subr.mxu0 0.0
  %260 = vmatpush1.msra.mxu0 0.0
  %261 = vmatprep.subr.mxu0 0.0
  %262 = vmatpush1.msra.mxu0 0.0
  %263 = vmatprep.subr.mxu0 0.0
  %264 = vmatpush1.msra.mxu0 0.0
  %265 = vmatprep.subr.mxu0 0.0
  %266 = vmatpush1.msra.mxu0 0.0
  %267 = vmatprep.subr.mxu0 0.0
  %268 = vmatpush1.msra.mxu0 0.0
  %269 = vmatprep.subr.mxu0 0.0
  %270 = vmatpush1.msra.mxu0 0.0
  %271 = vmatprep.subr.mxu0 0.0
  %272 = vmatpush1.msra.mxu0 0.0
  %273 = vmatprep.subr.mxu0 0.0
  %274 = vmatpush1.msra.mxu0 0.0
  %275 = vmatprep.subr.mxu0 0.0
  %276 = vmatpush1.msra.mxu0 0.0
  %277 = vmatprep.subr.mxu0 0.0
  %278 = vmatpush1.msra.mxu0 0.0
  %279 = vmatprep.subr.mxu0 0.0
  %280 = vmatpush1.msra.mxu0 0.0
  %281 = vmatprep.subr.mxu0 0.0
  %282 = vmatpush1.msra.mxu0 0.0
  %283 = vmatprep.subr.mxu0 0.0
  %284 = vmatpush1.msra.mxu0 0.0
  %285 = vmatprep.subr.mxu0 0.0
  %286 = vmatpush1.msra.mxu0 0.0
  %287 = vmatprep.subr.mxu0 0.0
  %288 = vmatpush1.msra.mxu0 0.0
  %289 = vmatprep.subr.mxu0 0.0
  %290 = vmatpush1.msra.mxu0 0.0
  %291 = vmatprep.subr.mxu0 0.0
  %292 = vmatpush1.msra.mxu0 0.0
  %293 = vmatprep.subr.mxu0 0.0
  %294 = vmatpush1.msra.mxu0 0.0
  %295 = vmatprep.subr.mxu0 0.0
  %296 = vmatpush1.msra.mxu0 0.0
  %297 = vmatprep.subr.mxu0 0.0
  %298 = vmatpush1.msra.mxu0 0.0
  %299 = vmatprep.subr.mxu0 0.0
  %300 = vmatpush1.msra.mxu0 0.0
  %301 = vmatprep.subr.mxu0 0.0
  %302 = vmatpush1.msra.mxu0 0.0
  %303 = vmatprep.subr.mxu0 0.0
  %304 = vmatpush1.msra.mxu0 0.0
  %305 = vmatprep.subr.mxu0 0.0
  %306 = vmatpush1.msra.mxu0 0.0
  %307 = vmatprep.mubr.f32.mxu0 0.0
  %308 = vmatmul.mubr.f32.gmra.mrb[0].mxu0 %v238
  %v309 = vpop.f32.mrb[0].mxu0
  %v310 = vadd.f32 0.0, %v309
  %v311 = vpop.f32.mrb[0].mxu0
  %312 = vmatprep.mubr.f32.mxu0 0.0
  %313 = vmatmul.mubr.f32.gmra.mrb[0].mxu0 %v241
  %v314 = vpop.f32.mrb[0].mxu0
  %v315 = vadd.f32 0.0, %v314
  %v316 = vpop.f32.mrb[0].mxu0
  %317 = vdwg.mxu0
  %319 = vset.pattern.permute.xlu0 0
  %320 = vperm.xlu0 %319, %v78
  %v321 = vpop.permute.xlu0 %320
  %324 = vset.pattern.permute.xlu0 0
  %325 = vperm.xlu0 %324, %v79
  %v326 = vpop.permute.xlu0 %325
  %v328 = vmul.f32 %v321, %v310
  %v329 = vmul.f32 %v326, %v315
  %v330 = vpack.c.bf16 %v329, %v328
  %331 = vmatprep.subr.bf16.mxu0 0
  %332 = vmatpush1.bf16.msra.mxu0 %v330
  %333 = vmatprep.subr.bf16.mxu0 0
  %334 = vmatpush1.bf16.msra.mxu0 0
  %335 = vmatprep.subr.bf16.mxu0 0
  %336 = vmatpush1.bf16.msra.mxu0 0
  %337 = vmatprep.subr.bf16.mxu0 0
  %338 = vmatpush1.bf16.msra.mxu0 0
  %339 = vmatprep.subr.bf16.mxu0 0
  %340 = vmatpush1.bf16.msra.mxu0 0
  %341 = vmatprep.subr.bf16.mxu0 0
  %342 = vmatpush1.bf16.msra.mxu0 0
  %343 = vmatprep.subr.bf16.mxu0 0
  %344 = vmatpush1.bf16.msra.mxu0 0
  %345 = vmatprep.subr.bf16.mxu0 0
  %346 = vmatpush1.bf16.msra.mxu0 0
  %347 = vmatprep.subr.bf16.mxu0 0
  %348 = vmatpush1.bf16.msra.mxu0 0
  %349 = vmatprep.subr.bf16.mxu0 0
  %350 = vmatpush1.bf16.msra.mxu0 0
  %351 = vmatprep.subr.bf16.mxu0 0
  %352 = vmatpush1.bf16.msra.mxu0 0
  %353 = vmatprep.subr.bf16.mxu0 0
  %354 = vmatpush1.bf16.msra.mxu0 0
  %355 = vmatprep.subr.bf16.mxu0 0
  %356 = vmatpush1.bf16.msra.mxu0 0
  %357 = vmatprep.subr.bf16.mxu0 0
  %358 = vmatpush1.bf16.msra.mxu0 0
  %359 = vmatprep.subr.bf16.mxu0 0
  %360 = vmatpush1.bf16.msra.mxu0 0
  %361 = vmatprep.subr.bf16.mxu0 0
  %362 = vmatpush1.bf16.msra.mxu0 0
  %363 = vmatprep.mubr.bf16.mxu0 0
  %364 = vmatmul.mubr.bf16.gmra.mrb[0].mxu0 %v173
  %v365 = vpop.f32.mrb[0].mxu0
  %v366 = vadd.f32 0.0, %v365
  %v367 = vpop.f32.mrb[0].mxu0
  %v368 = vpop.f32.mrb[0].mxu0
  %v369 = vadd.f32 0.0, %v368
  %v370 = vpop.f32.mrb[0].mxu0
  %371 = vdwg.mxu0
  %373 = vset.pattern.permute.xlu0 0
  %374 = vperm.xlu0 %373, %v76
  %v375 = vpop.permute.xlu0 %374
  %378 = vset.pattern.permute.xlu0 0
  %379 = vperm.xlu0 %378, %v77
  %v380 = vpop.permute.xlu0 %379
  %v382 = vmul.f32 %v375, %v366
  %v383 = vmul.f32 %v380, %v369
  %v384 = vld [vmem:[%s8] sm:$0x1]
  %v386 = vlaneseq
  %v387 = vshrl.u32 %v386, 7
  %v388 = vsub.s32 0, %v387
  %v389 = vrot.slane %v384, %v388
  %v391 = vadd.f32 %v382, %v389
  %v392 = vadd.f32 %v383, %v389
  %v393 = vld [vmem:[%s4] sm:$0xff]
  %v394 = vld [vmem:[%s4 + $0x8] sm:$0xff]
  %vm395 = vcmp.gt.f32.partialorder %v393, 0.0
  %vm396 = vcmp.gt.f32.partialorder %v394, 0.0
  %v397 = vsel %vm395, 1, 0
  %v398 = vsel %vm396, 1, 0
  %399 = vset.pattern.permute.xlu0 0
  %400 = vperm.xlu0 %399, %v397
  %v401 = vpop.permute.xlu0 %400
  %402 = vset.pattern.permute.xlu0 0
  %403 = vperm.xlu0 %402, %v398
  %v404 = vpop.permute.xlu0 %403
  %vm405 = vcmp.eq.s32.totalorder %v401, 1
  %vm406 = vcmp.eq.s32.totalorder %v404, 1
  %v407 = vsel %vm405, %v391, -3.4028235e+38
  %v408 = vsel %vm406, %v392, -3.4028235e+38
  %v409 = vrot.slane %v407, 4
  %v410 = vmax.f32 %v407, %v409
  %v411 = vrot.slane %v410, 2
  %v412 = vmax.f32 %v410, %v411
  %v413 = vrot.slane %v412, 1
  %v414 = vmax.f32 %v412, %v413
  %v415 = vrot.slane %v408, 4
  %v416 = vmax.f32 %v408, %v415
  %v417 = vrot.slane %v416, 2
  %v418 = vmax.f32 %v416, %v417
  %v419 = vrot.slane %v418, 1
  %v420 = vmax.f32 %v418, %v419
  %v421 = vld [vmem:[%s9] sm:$0xff]
  %v422 = vld [vmem:[%s9 + $0x8] sm:$0xff]
  %v423 = vld [vmem:[%s9 + $0x10] sm:$0xff]
  %v424 = vld [vmem:[%s9 + $0x18] sm:$0xff]
  %v425 = vld [vmem:[%s9 + $0x20] sm:$0xff]
  %v426 = vld [vmem:[%s9 + $0x28] sm:$0xff]
  %v427 = vld [vmem:[%s9 + $0x30] sm:$0xff]
  %v428 = vld [vmem:[%s9 + $0x38] sm:$0xff]
  %v429 = vld [vmem:[%s9 + $0x40] sm:$0xff]
  %v430 = vld [vmem:[%s9 + $0x48] sm:$0xff]
  %v431 = vld [vmem:[%s9 + $0x50] sm:$0xff]
  %v432 = vld [vmem:[%s9 + $0x58] sm:$0xff]
  %v433 = vld [vmem:[%s9 + $0x60] sm:$0xff]
  %v434 = vld [vmem:[%s9 + $0x68] sm:$0xff]
  %v435 = vld [vmem:[%s9 + $0x70] sm:$0xff]
  %v436 = vld [vmem:[%s9 + $0x78] sm:$0xff]
  %s437 = sld [smem:[#allocation3]]
  %v438 = vstv %s437
  %vm441 = vcmask 1041409
  %v442 = vsel %vm441, %v420, %v414
  %444 = vmatprep.subr.mxu0 0.0
  %445 = vmatpush1.msra.mxu0 %v421
  %446 = vmatprep.subr.mxu0 0.0
  %447 = vmatpush1.msra.mxu0 %v422
  %448 = vmatprep.subr.mxu0 0.0
  %449 = vmatpush1.msra.mxu0 %v423
  %450 = vmatprep.subr.mxu0 0.0
  %451 = vmatpush1.msra.mxu0 %v424
  %452 = vmatprep.subr.mxu0 0.0
  %453 = vmatpush1.msra.mxu0 %v425
  %454 = vmatprep.subr.mxu0 0.0
  %455 = vmatpush1.msra.mxu0 %v426
  %456 = vmatprep.subr.mxu0 0.0
  %457 = vmatpush1.msra.mxu0 %v427
  %458 = vmatprep.subr.mxu0 0.0
  %459 = vmatpush1.msra.mxu0 %v428
  %460 = vmatprep.subr.mxu0 0.0
  %461 = vmatpush1.msra.mxu0 %v429
  %462 = vmatprep.subr.mxu0 0.0
  %463 = vmatpush1.msra.mxu0 %v430
  %464 = vmatprep.subr.mxu0 0.0
  %465 = vmatpush1.msra.mxu0 %v431
  %466 = vmatprep.subr.mxu0 0.0
  %467 = vmatpush1.msra.mxu0 %v432
  %468 = vmatprep.subr.mxu0 0.0
  %469 = vmatpush1.msra.mxu0 %v433
  %470 = vmatprep.subr.mxu0 0.0
  %471 = vmatpush1.msra.mxu0 %v434
  %472 = vmatprep.subr.mxu0 0.0
  %473 = vmatpush1.msra.mxu0 %v435
  %474 = vmatprep.subr.mxu0 0.0
  %475 = vmatpush1.msra.mxu0 %v436
  %476 = vmatprep.subr.mxu0 0.0
  %477 = vmatpush1.msra.mxu0 0.0
  %478 = vmatprep.subr.mxu0 0.0
  %479 = vmatpush1.msra.mxu0 0.0
  %480 = vmatprep.subr.mxu0 0.0
  %481 = vmatpush1.msra.mxu0 0.0
  %482 = vmatprep.subr.mxu0 0.0
  %483 = vmatpush1.msra.mxu0 0.0
  %484 = vmatprep.subr.mxu0 0.0
  %485 = vmatpush1.msra.mxu0 0.0
  %486 = vmatprep.subr.mxu0 0.0
  %487 = vmatpush1.msra.mxu0 0.0
  %488 = vmatprep.subr.mxu0 0.0
  %489 = vmatpush1.msra.mxu0 0.0
  %490 = vmatprep.subr.mxu0 0.0
  %491 = vmatpush1.msra.mxu0 0.0
  %492 = vmatprep.subr.mxu0 0.0
  %493 = vmatpush1.msra.mxu0 0.0
  %494 = vmatprep.subr.mxu0 0.0
  %495 = vmatpush1.msra.mxu0 0.0
  %496 = vmatprep.subr.mxu0 0.0
  %497 = vmatpush1.msra.mxu0 0.0
  %498 = vmatprep.subr.mxu0 0.0
  %499 = vmatpush1.msra.mxu0 0.0
  %500 = vmatprep.subr.mxu0 0.0
  %501 = vmatpush1.msra.mxu0 0.0
  %502 = vmatprep.subr.mxu0 0.0
  %503 = vmatpush1.msra.mxu0 0.0
  %504 = vmatprep.subr.mxu0 0.0
  %505 = vmatpush1.msra.mxu0 0.0
  %506 = vmatprep.subr.mxu0 0.0
  %507 = vmatpush1.msra.mxu0 0.0
  %508 = vmatprep.mubr.f32.mxu0 0.0
  %509 = vmatmul.mubr.f32.gmra.mrb[0].mxu0 %v442
  %v510 = vpop.f32.mrb[0].mxu0
  %v511 = vadd.f32 %v438, %v510
  %v512 = vpop.f32.mrb[0].mxu0
  %513 = vdwg.mxu0
  %v514 = vxor.u32 %v511, 2147483648
  %v515 = vmul.f32 %v514, 1.442695
  %v516 = vpow.pop %v515
  %v517 = vadd.f32 %v516, 1.0
  %v518 = vrcp.pop %v517
  %v519 = vmul.f32 1.0, %v518
  %vm520 = vcmask 1024
  %521 = vst.msk [vmem:[%s11] sm:$0x3] %vm520, %v519
  // Predicated region
  $region46: #{mynet_forward.3} parent=0 // pred_check
    _
  $region47: #{mynet_forward.3} parent=0 // pred_check_branch
    %523 = sbr.rel (0) target = $region49
  $region48: #{mynet_forward.3} parent=0 // pred_region
    _
  $region49: #{mynet_forward.3} parent=0 // pred_fallthru
    _
  // Predicated region
  $region50: #{mynet_forward.3} parent=0 // pred_check
    _
  $region51: #{mynet_forward.3} parent=0 // pred_check_branch
    %525 = sbr.rel (0) target = $region53
  $region52: #{mynet_forward.3} parent=0 // pred_region
    _
  $region53: #{mynet_forward.3} parent=0 // pred_fallthru
    _

// kernel: mynet_forward.2
$region0: #{mynet_forward.2}
  #allocation0 [shape = 'u32[]', space=smem, size = 0x4, offset = 0x4, fixed_abs, tag = 'smem constant byte address 0x4 - core index']
  #allocation1 [shape = 'u32[144,128]{1,0:T(1,128)}', space=vmem, size = 0x12000, scoped, tag = 'internal scratch']
  %s0 = inlined_call_operand.vmem [shape: bf16[28,16,16], index: 0, kind: input, shape index: {}]
  %s1 = inlined_call_operand.vmem [shape: f32[2,16], index: 1, kind: input, shape index: {}]
  %s2 = inlined_call_operand.vmem [shape: f32[28,8,2], index: 2, kind: input, shape index: {}]
  %s3 = inlined_call_operand.vmem [shape: f32[8,1], index: 3, kind: input, shape index: {}]
  %s4 = inlined_call_operand.vmem [shape: f32[8,16], index: 4, kind: output, shape index: {}]
  %s5 = sld [smem:[#allocation0]]
  $region57: #{mynet_forward.2} parent=0
    _
  %s7 = ssub.s32 1, %s5
  %s8 = scalar_select 0, %s7, %s5
  loop: start=0, step=1, limit=4
  $region2: #{mynet_forward.2} parent=0 // loop_pre_header
    _
  $region3: #{mynet_forward.2} parent=0 // loop_header
    %s10 = sphi 0, %s14
    %p11 = scmp.ge.s32.totalorder %s10, 4
    %s17 = sphi 0, %s29
    %s18 = sphi 0, %s25
    %s19 = sphi 0, %s17
    %s20 = sphi 0, %s18
    %s21 = sphi 0, %s19
    %s22 = sphi 0, %s20
    %s34 = sphi 0, %s36
    %s37 = sphi 0, %s34
    %s38 = sphi 0, %s37
    %s54 = sphi 0, %s38
    %s58 = sphi 0, %s58
    %s60 = sphi 0, %s58
    %s61 = sphi 0, %s60
    %s75 = sphi 0, %s61
    %s81 = sphi 0, %s83
    %s84 = sphi 0, %s81
    %s85 = sphi 0, %s84
    %s101 = sphi 0, %s85
    %s105 = sphi 0, %s105
    %s107 = sphi 0, %s105
    %s108 = sphi 0, %s107
    %s122 = sphi 0, %s108
    %s128 = sphi 0, %s130
    %s131 = sphi 0, %s128
    %s132 = sphi 0, %s131
    %s148 = sphi 0, %s132
  $region4: #{mynet_forward.2} parent=0 // loop_header_branch
    %13 = sbr.rel (%p11) target = $region8
  $region5: #{mynet_forward.2} parent=0 // loop_body
    %s15 = ssub.s32 %s10, 1
    %s16 = ssub.s32 %s10, 2
    %s23 = sadd.s32 1, %s18
    %p24 = scmp.ge.s32.totalorder %s23, 2
    %s25 = scalar_select %p24, 0, %s23
    %s26 = sadd.s32 1, %s17
    %s27 = scalar_select %p24, %s26, %s17
    %p28 = scmp.ge.s32.totalorder %s27, 1
    %s29 = scalar_select %p28, 0, %s27
    %s30 = ssub.s32 %s18, %s25
    %s31 = ssub.s32 %s17, %s29
    %s32 = sor.u32 %s30, %s31
    %p33 = scmp.eq.s32.totalorder %s32, 0
    %s35 = sadd.s32 %s34, 1
    %s36 = scalar_select %p33, %s34, %s35
    %p39 = pneg %p33
    %p40 = scmp.eq.s32.totalorder %s10, 1
    %p41 = por %p39, %p40
    %p42 = scmp.ne.s32.totalorder %s34, %s37
    %p43 = scmp.eq.s32.totalorder %s10, 0
    %p44 = por %p42, %p43
    %p45 = scmp.ne.s32.totalorder %s34, %s37
    %p46 = scmp.eq.s32.totalorder %s15, 1
    %p47 = por %p45, %p46
    %p48 = scmp.ne.s32.totalorder %s37, %s38
    %p49 = scmp.eq.s32.totalorder %s15, 0
    %p50 = por %p48, %p49
    %p51 = scmp.ne.s32.totalorder %s37, %s38
    %p52 = scmp.eq.s32.totalorder %s16, 1
    %p53 = por %p51, %p52
    %p55 = scmp.ne.s32.totalorder %s38, %s54
    %p56 = scmp.eq.s32.totalorder %s16, 0
    %p57 = por %p55, %p56
    %s59 = sadd.s32 %s58, 1
    %p62 = scmp.eq.s32.totalorder %s10, 1
    %p63 = scmp.ne.s32.totalorder %s58, %s60
    %p64 = scmp.eq.s32.totalorder %s10, 0
    %p65 = por %p63, %p64
    %p66 = scmp.ne.s32.totalorder %s58, %s60
    %p67 = scmp.eq.s32.totalorder %s15, 1
    %p68 = por %p66, %p67
    %p69 = scmp.ne.s32.totalorder %s60, %s61
    %p70 = scmp.eq.s32.totalorder %s15, 0
    %p71 = por %p69, %p70
    %p72 = scmp.ne.s32.totalorder %s60, %s61
    %p73 = scmp.eq.s32.totalorder %s16, 1
    %p74 = por %p72, %p73
    %p76 = scmp.ne.s32.totalorder %s61, %s75
    %p77 = scmp.eq.s32.totalorder %s16, 0
    %p78 = por %p76, %p77
    %s79 = ssub.s32 %s18, %s25
    %p80 = scmp.eq.s32.totalorder %s79, 0
    %s82 = sadd.s32 %s81, 1
    %s83 = scalar_select %p80, %s81, %s82
    %p86 = pneg %p80
    %p87 = scmp.eq.s32.totalorder %s10, 1
    %p88 = por %p86, %p87
    %p89 = scmp.ne.s32.totalorder %s81, %s84
    %p90 = scmp.eq.s32.totalorder %s10, 0
    %p91 = por %p89, %p90
    %p92 = scmp.ne.s32.totalorder %s81, %s84
    %p93 = scmp.eq.s32.totalorder %s15, 1
    %p94 = por %p92, %p93
    %p95 = scmp.ne.s32.totalorder %s84, %s85
    %p96 = scmp.eq.s32.totalorder %s15, 0
    %p97 = por %p95, %p96
    %p98 = scmp.ne.s32.totalorder %s84, %s85
    %p99 = scmp.eq.s32.totalorder %s16, 1
    %p100 = por %p98, %p99
    %p102 = scmp.ne.s32.totalorder %s85, %s101
    %p103 = scmp.eq.s32.totalorder %s16, 0
    %p104 = por %p102, %p103
    %s106 = sadd.s32 %s105, 1
    %p109 = scmp.eq.s32.totalorder %s10, 1
    %p110 = scmp.ne.s32.totalorder %s105, %s107
    %p111 = scmp.eq.s32.totalorder %s10, 0
    %p112 = por %p110, %p111
    %p113 = scmp.ne.s32.totalorder %s105, %s107
    %p114 = scmp.eq.s32.totalorder %s15, 1
    %p115 = por %p113, %p114
    %p116 = scmp.ne.s32.totalorder %s107, %s108
    %p117 = scmp.eq.s32.totalorder %s15, 0
    %p118 = por %p116, %p117
    %p119 = scmp.ne.s32.totalorder %s107, %s108
    %p120 = scmp.eq.s32.totalorder %s16, 1
    %p121 = por %p119, %p120
    %p123 = scmp.ne.s32.totalorder %s108, %s122
    %p124 = scmp.eq.s32.totalorder %s16, 0
    %p125 = por %p123, %p124
    %s126 = ssub.s32 %s17, %s29
    %p127 = scmp.eq.s32.totalorder %s126, 0
    %s129 = sadd.s32 %s128, 1
    %s130 = scalar_select %p127, %s128, %s129
    %p133 = pneg %p127
    %p134 = scmp.eq.s32.totalorder %s10, 1
    %p135 = por %p133, %p134
    %p136 = scmp.ne.s32.totalorder %s128, %s131
    %p137 = scmp.eq.s32.totalorder %s10, 0
    %p138 = por %p136, %p137
    %p139 = scmp.ne.s32.totalorder %s128, %s131
    %p140 = scmp.eq.s32.totalorder %s15, 1
    %p141 = por %p139, %p140
    %p142 = scmp.ne.s32.totalorder %s131, %s132
    %p143 = scmp.eq.s32.totalorder %s15, 0
    %p144 = por %p142, %p143
    %p145 = scmp.ne.s32.totalorder %s131, %s132
    %p146 = scmp.eq.s32.totalorder %s16, 1
    %p147 = por %p145, %p146
    %p149 = scmp.ne.s32.totalorder %s132, %s148
    %p150 = scmp.eq.s32.totalorder %s16, 0
    %p151 = por %p149, %p150
    %p152 = scmp.le.s32.totalorder 1, %s10
    %p153 = scmp.lt.s32.totalorder %s10, 3
    %p154 = pnand %p152, %p153
    %p155 = pneg %p154
    // Predicated region
    $region9: #{mynet_forward.2} parent=5 // pred_check
      _
    $region10: #{mynet_forward.2} parent=5 // pred_check_branch
      %157 = sbr.rel (%p154) target = $region12
    $region11: #{mynet_forward.2} parent=5 // pred_region
      %s158 = ssub.s32 %s10, 1
      // Predicated region
      $region13: #{mynet_forward.2} parent=11 // pred_check
        %p159 = pneg %p71
      $region14: #{mynet_forward.2} parent=11 // pred_check_branch
        %161 = sbr.rel (%p159) target = $region16
      $region15: #{mynet_forward.2} parent=11 // pred_region
        _
      $region16: #{mynet_forward.2} parent=11 // pred_fallthru
        _
      // Predicated region
      $region17: #{mynet_forward.2} parent=11 // pred_check
        %p162 = pneg %p118
      $region18: #{mynet_forward.2} parent=11 // pred_check_branch
        %164 = sbr.rel (%p162) target = $region20
      $region19: #{mynet_forward.2} parent=11 // pred_region
        _
      $region20: #{mynet_forward.2} parent=11 // pred_fallthru
        _
    $region12: #{mynet_forward.2} parent=5 // pred_fallthru
      _
    %p165 = scmp.lt.s32.totalorder %s10, 2
    // Predicated region
    $region21: #{mynet_forward.2} parent=5 // pred_check
      %p166 = pneg %p165
    $region22: #{mynet_forward.2} parent=5 // pred_check_branch
      %168 = sbr.rel (%p166) target = $region24
    $region23: #{mynet_forward.2} parent=5 // pred_region
      // Predicated region
      $region25: #{mynet_forward.2} parent=23 // pred_check
        %p169 = pneg %p44
      $region26: #{mynet_forward.2} parent=23 // pred_check_branch
        %171 = sbr.rel (%p169) target = $region28
      $region27: #{mynet_forward.2} parent=23 // pred_region
        %s172 = smul.u32 14, %s18
        %p173 = scmp.lt.s32.totalorder %s172, 27
        %s174 = scalar_select %p173, %s172, 27
        %p175 = scmp.lt.s32.totalorder %s17, 0
        %s176 = scalar_select %p175, %s17, 0
        %s177 = smul.addr %s174, 2
        %s178 = sadd.s32 %s176, %s177
        %s179 = smul.addr %s178, 4
        %s180 = scalar_lea.vmem %s0, %s179
        %s181 = smul.u32 14, %s18
      $region28: #{mynet_forward.2} parent=23 // pred_fallthru
        _
      // Predicated region
      $region29: #{mynet_forward.2} parent=23 // pred_check
        %p182 = pneg %p91
      $region30: #{mynet_forward.2} parent=23 // pred_check_branch
        %184 = sbr.rel (%p182) target = $region32
      $region31: #{mynet_forward.2} parent=23 // pred_region
        %s185 = smul.u32 14, %s18
        %p186 = scmp.lt.s32.totalorder %s185, 27
        %s187 = scalar_select %p186, %s185, 27
        %s188 = smul.addr %s187, 8
        %s189 = scalar_lea.vmem %s2, %s188
        %s190 = smul.u32 14, %s18
      $region32: #{mynet_forward.2} parent=23 // pred_fallthru
        _
    $region24: #{mynet_forward.2} parent=5 // pred_fallthru
      _
    %p191 = scmp.le.s32.totalorder 1, %s10
    %p192 = scmp.lt.s32.totalorder %s10, 3
    %p193 = pnand %p191, %p192
    %p194 = pneg %p193
    // Predicated region
    $region33: #{mynet_forward.2} parent=5 // pred_check
      _
    $region34: #{mynet_forward.2} parent=5 // pred_check_branch
      %196 = sbr.rel (%p193) target = $region36
    $region35: #{mynet_forward.2} parent=5 // pred_region
      %s197 = ssub.s32 %s10, 1
      %s198 = smul.u32 14, %s20
      %p199 = scmp.lt.s32.totalorder %s198, 27
      %s200 = scalar_select %p199, %s198, 27
      %p201 = scmp.lt.s32.totalorder %s19, 0
      %s202 = scalar_select %p201, %s19, 0
      %s203 = smul.addr %s200, 2
      %s204 = sadd.s32 %s202, %s203
      %s205 = smul.addr %s204, 4
      %s206 = scalar_lea.vmem %s0, %s205
      %p207 = pneg %p50
      %p208 = pneg %p47
      %p209 = pneg %p71
      %p210 = pneg %p68
      %s211 = smul.u32 14, %s20
      %p212 = scmp.lt.s32.totalorder %s211, 27
      %s213 = scalar_select %p212, %s211, 27
      %s214 = smul.addr %s213, 8
      %s215 = scalar_lea.vmem %s2, %s214
      %p216 = pneg %p97
      %p217 = pneg %p94
      %p218 = pneg %p118
      %p219 = pneg %p115
      %p220 = pneg %p144
      %p221 = pneg %p141
      %p222 = scmp.lt.s32.totalorder %s19, 0
      %s223 = scalar_select %p222, %s19, 0
      %s224 = smul.addr %s223, 8
      %s225 = scalar_lea.vmem %s4, %s224
      %s226 = smul.u32 14, %s20
      %p227 = scmp.lt.s32.totalorder %s226, 27
      %s228 = scalar_select %p227, %s226, 27
      %p229 = scmp.lt.s32.totalorder %s19, 0
      %s230 = scalar_select %p229, %s19, 0
      %s231 = smul.addr %s228, 2
      %s232 = sadd.s32 %s230, %s231
      %s233 = smul.addr %s232, 4
      %s234 = scalar_lea.vmem %s0, %s233
      %s235 = smul.u32 14, %s20
      %s236 = smul.u32 14, %s20
      %p237 = scmp.lt.s32.totalorder %s236, 27
      %s238 = scalar_select %p237, %s236, 27
      %s239 = smul.addr %s238, 8
      %s240 = scalar_lea.vmem %s2, %s239
      %s241 = smul.u32 14, %s20
      %p242 = scmp.lt.s32.totalorder %s19, 0
      %s243 = scalar_select %p242, %s19, 0
      %s244 = smul.addr %s243, 8
      %s245 = scalar_lea.vmem %s4, %s244
      %p247 = scmp.eq.s32.totalorder %s20, 0
      // Predicated region
      $region37: #{mynet_forward.2} parent=35 // pred_check
        %p248 = pneg %p247
      $region38: #{mynet_forward.2} parent=35 // pred_check_branch
        %250 = sbr.rel (%p248) target = $region40
      $region39: #{mynet_forward.2} parent=35 // pred_region
        %vm251 = vcmask 130048
        %252 = vst.msk [vmem:[%s245] sm:$0xff] %vm251, 0.0
      $region40: #{mynet_forward.2} parent=35 // pred_fallthru
        _
      %v253 = vld [vmem:[%s1] sm:$0x3]
      %v254 = vld [vmem:[%s245] sm:$0xff]
      %v255 = vld [vmem:[%s240] sm:$0xff]
      %257 = vset.pattern.permute.xlu0 0
      %258 = vperm.xlu0 %257, %v255
      %v259 = vpop.permute.xlu0 %258
      %v261 = vlaneseq
      %v262 = vshrl.u32 %v261, 7
      %v263 = vsub.s32 0, %v262
      %v264 = vrot.slane %v253, %v263
      %v265 = vmul.f32 %v259, %v264
      %266 = vset.pattern.permute.xlu0 1
      %267 = vperm.xlu0 %266, %v255
      %v268 = vpop.permute.xlu0 %267
      %v270 = vlaneseq
      %v271 = vshrl.u32 %v270, 7
      %v272 = vsub.s32 1, %v271
      %v273 = vrot.slane %v253, %v272
      %v274 = vmul.f32 %v268, %v273
      %v275 = vadd.f32 %v265, %v274
      %v276 = vpack.c.bf16 %v275, %v275
      %v277 = vld [vmem:[%s234] sm:$0xf]
      %v278 = vld [vmem:[%s234 + $0x4] sm:$0xf]
      %v281 = vunpack.c.l.b16 %v277
      %v282 = vunpack.c.l.b16 %v278
      %v283 = vpack.c.b16 %v282, %v281
      %vm285 = vcmask 130048
      %v287 = vsel %vm285, %v276, 0
      %289 = vmatprep.subr.bf16.mxu0 0
      %290 = vmatpush1.bf16.msra.mxu0 %v283
      %291 = vmatprep.subr.bf16.mxu0 0
      %292 = vmatpush1.bf16.msra.mxu0 0
      %293 = vmatprep.subr.bf16.mxu0 0
      %294 = vmatpush1.bf16.msra.mxu0 0
      %295 = vmatprep.subr.bf16.mxu0 0
      %296 = vmatpush1.bf16.msra.mxu0 0
      %297 = vmatprep.subr.bf16.mxu0 0
      %298 = vmatpush1.bf16.msra.mxu0 0
      %299 = vmatprep.subr.bf16.mxu0 0
      %300 = vmatpush1.bf16.msra.mxu0 0
      %301 = vmatprep.subr.bf16.mxu0 0
      %302 = vmatpush1.bf16.msra.mxu0 0
      %303 = vmatprep.subr.bf16.mxu0 0
      %304 = vmatpush1.bf16.msra.mxu0 0
      %305 = vmatprep.subr.bf16.mxu0 0
      %306 = vmatpush1.bf16.msra.mxu0 0
      %307 = vmatprep.subr.bf16.mxu0 0
      %308 = vmatpush1.bf16.msra.mxu0 0
      %309 = vmatprep.subr.bf16.mxu0 0
      %310 = vmatpush1.bf16.msra.mxu0 0
      %311 = vmatprep.subr.bf16.mxu0 0
      %312 = vmatpush1.bf16.msra.mxu0 0
      %313 = vmatprep.subr.bf16.mxu0 0
      %314 = vmatpush1.bf16.msra.mxu0 0
      %315 = vmatprep.subr.bf16.mxu0 0
      %316 = vmatpush1.bf16.msra.mxu0 0
      %317 = vmatprep.subr.bf16.mxu0 0
      %318 = vmatpush1.bf16.msra.mxu0 0
      %319 = vmatprep.subr.bf16.mxu0 0
      %320 = vmatpush1.bf16.msra.mxu0 0
      %321 = vmatprep.mubr.bf16.mxu0 0
      %322 = vmatmul.mubr.bf16.gmra.mrb[0].mxu0 %v287
      %v323 = vpop.f32.mrb[0].mxu0
      %v324 = vadd.f32 0.0, %v323
      %v325 = vpop.f32.mrb[0].mxu0
      %v326 = vpop.f32.mrb[0].mxu0
      %v327 = vpop.f32.mrb[0].mxu0
      %328 = vdwg.mxu0
      %v329 = vadd.f32 %v254, %v324
      %s330 = scalar_lea.vmem %s240, 8
      %v331 = vld [vmem:[%s330] sm:$0xff]
      %333 = vset.pattern.permute.xlu0 0
      %334 = vperm.xlu0 %333, %v331
      %v335 = vpop.permute.xlu0 %334
      %v337 = vmul.f32 %v335, %v264
      %338 = vset.pattern.permute.xlu0 1
      %339 = vperm.xlu0 %338, %v331
      %v340 = vpop.permute.xlu0 %339
      %v342 = vmul.f32 %v340, %v273
      %v343 = vadd.f32 %v337, %v342
      %v344 = vpack.c.bf16 %v343, %v343
      %s345 = scalar_lea.vmem %s234, 8
      %v346 = vld [vmem:[%s345] sm:$0xf]
      %v347 = vld [vmem:[%s345 + $0x4] sm:$0xf]
      %v350 = vunpack.c.l.b16 %v346
      %v351 = vunpack.c.l.b16 %v347
      %v352 = vpack.c.b16 %v351, %v350
      %v355 = vsel %vm285, %v344, 0
      %357 = vmatprep.subr.bf16.mxu0 0
      %358 = vmatpush1.bf16.msra.mxu0 %v352
      %359 = vmatprep.subr.bf16.mxu0 0
      %360 = vmatpush1.bf16.msra.mxu0 0
      %361 = vmatprep.subr.bf16.mxu0 0
      %362 = vmatpush1.bf16.msra.mxu0 0
      %363 = vmatprep.subr.bf16.mxu0 0
      %364 = vmatpush1.bf16.msra.mxu0 0
      %365 = vmatprep.subr.bf16.mxu0 0
      %366 = vmatpush1.bf16.msra.mxu0 0
      %367 = vmatprep.subr.bf16.mxu0 0
      %368 = vmatpush1.bf16.msra.mxu0 0
      %369 = vmatprep.subr.bf16.mxu0 0
      %370 = vmatpush1.bf16.msra.mxu0 0
      %371 = vmatprep.subr.bf16.mxu0 0
      %372 = vmatpush1.bf16.msra.mxu0 0
      %373 = vmatprep.subr.bf16.mxu0 0
      %374 = vmatpush1.bf16.msra.mxu0 0
      %375 = vmatprep.subr.bf16.mxu0 0
      %376 = vmatpush1.bf16.msra.mxu0 0
      %377 = vmatprep.subr.bf16.mxu0 0
      %378 = vmatpush1.bf16.msra.mxu0 0
      %379 = vmatprep.subr.bf16.mxu0 0
      %380 = vmatpush1.bf16.msra.mxu0 0
      %381 = vmatprep.subr.bf16.mxu0 0
      %382 = vmatpush1.bf16.msra.mxu0 0
      %383 = vmatprep.subr.bf16.mxu0 0
      %384 = vmatpush1.bf16.msra.mxu0 0
      %385 = vmatprep.subr.bf16.mxu0 0
      %386 = vmatpush1.bf16.msra.mxu0 0
      %387 = vmatprep.subr.bf16.mxu0 0
      %388 = vmatpush1.bf16.msra.mxu0 0
      %389 = vmatprep.mubr.bf16.mxu0 0
      %390 = vmatmul.mubr.bf16.gmra.mrb[0].mxu0 %v355
      %v391 = vpop.f32.mrb[0].mxu0
      %v392 = vadd.f32 0.0, %v391
      %v393 = vpop.f32.mrb[0].mxu0
      %v394 = vpop.f32.mrb[0].mxu0
      %v395 = vpop.f32.mrb[0].mxu0
      %396 = vdwg.mxu0
      %v397 = vadd.f32 %v329, %v392
      %s398 = scalar_lea.vmem %s240, 16
      %v399 = vld [vmem:[%s398] sm:$0xff]
      %401 = vset.pattern.permute.xlu0 0
      %402 = vperm.xlu0 %401, %v399
      %v403 = vpop.permute.xlu0 %402
      %v405 = vmul.f32 %v403, %v264
      %406 = vset.pattern.permute.xlu0 1
      %407 = vperm.xlu0 %406, %v399
      %v408 = vpop.permute.xlu0 %407
      %v410 = vmul.f32 %v408, %v273
      %v411 = vadd.f32 %v405, %v410
      %v412 = vpack.c.bf16 %v411, %v411
      %s413 = scalar_lea.vmem %s234, 16
      %v414 = vld [vmem:[%s413] sm:$0xf]
      %v415 = vld [vmem:[%s413 + $0x4] sm:$0xf]
      %v418 = vunpack.c.l.b16 %v414
      %v419 = vunpack.c.l.b16 %v415
      %v420 = vpack.c.b16 %v419, %v418
      %v423 = vsel %vm285, %v412, 0
      %425 = vmatprep.subr.bf16.mxu0 0
      %426 = vmatpush1.bf16.msra.mxu0 %v420
      %427 = vmatprep.subr.bf16.mxu0 0
      %428 = vmatpush1.bf16.msra.mxu0 0
      %429 = vmatprep.subr.bf16.mxu0 0
      %430 = vmatpush1.bf16.msra.mxu0 0
      %431 = vmatprep.subr.bf16.mxu0 0
      %432 = vmatpush1.bf16.msra.mxu0 0
      %433 = vmatprep.subr.bf16.mxu0 0
      %434 = vmatpush1.bf16.msra.mxu0 0
      %435 = vmatprep.subr.bf16.mxu0 0
      %436 = vmatpush1.bf16.msra.mxu0 0
      %437 = vmatprep.subr.bf16.mxu0 0
      %438 = vmatpush1.bf16.msra.mxu0 0
      %439 = vmatprep.subr.bf16.mxu0 0
      %440 = vmatpush1.bf16.msra.mxu0 0
      %441 = vmatprep.subr.bf16.mxu0 0
      %442 = vmatpush1.bf16.msra.mxu0 0
      %443 = vmatprep.subr.bf16.mxu0 0
      %444 = vmatpush1.bf16.msra.mxu0 0
      %445 = vmatprep.subr.bf16.mxu0 0
      %446 = vmatpush1.bf16.msra.mxu0 0
      %447 = vmatprep.subr.bf16.mxu0 0
      %448 = vmatpush1.bf16.msra.mxu0 0
      %449 = vmatprep.subr.bf16.mxu0 0
      %450 = vmatpush1.bf16.msra.mxu0 0
      %451 = vmatprep.subr.bf16.mxu0 0
      %452 = vmatpush1.bf16.msra.mxu0 0
      %453 = vmatprep.subr.bf16.mxu0 0
      %454 = vmatpush1.bf16.msra.mxu0 0
      %455 = vmatprep.subr.bf16.mxu0 0
      %456 = vmatpush1.bf16.msra.mxu0 0
      %457 = vmatprep.mubr.bf16.mxu0 0
      %458 = vmatmul.mubr.bf16.gmra.mrb[0].mxu0 %v423
      %v459 = vpop.f32.mrb[0].mxu0
      %v460 = vadd.f32 0.0, %v459
      %v461 = vpop.f32.mrb[0].mxu0
      %v462 = vpop.f32.mrb[0].mxu0
      %v463 = vpop.f32.mrb[0].mxu0
      %464 = vdwg.mxu0
      %v465 = vadd.f32 %v397, %v460
      %s466 = scalar_lea.vmem %s240, 24
      %v467 = vld [vmem:[%s466] sm:$0xff]
      %469 = vset.pattern.permute.xlu0 0
      %470 = vperm.xlu0 %469, %v467
      %v471 = vpop.permute.xlu0 %470
      %v473 = vmul.f32 %v471, %v264
      %474 = vset.pattern.permute.xlu0 1
      %475 = vperm.xlu0 %474, %v467
      %v476 = vpop.permute.xlu0 %475
      %v478 = vmul.f32 %v476, %v273
      %v479 = vadd.f32 %v473, %v478
      %v480 = vpack.c.bf16 %v479, %v479
      %s481 = scalar_lea.vmem %s234, 24
      %v482 = vld [vmem:[%s481] sm:$0xf]
      %v483 = vld [vmem:[%s481 + $0x4] sm:$0xf]
      %v486 = vunpack.c.l.b16 %v482
      %v487 = vunpack.c.l.b16 %v483
      %v488 = vpack.c.b16 %v487, %v486
      %v491 = vsel %vm285, %v480, 0
      %493 = vmatprep.subr.bf16.mxu0 0
      %494 = vmatpush1.bf16.msra.mxu0 %v488
      %495 = vmatprep.subr.bf16.mxu0 0
      %496 = vmatpush1.bf16.msra.mxu0 0
      %497 = vmatprep.subr.bf16.mxu0 0
      %498 = vmatpush1.bf16.msra.mxu0 0
      %499 = vmatprep.subr.bf16.mxu0 0
      %500 = vmatpush1.bf16.msra.mxu0 0
      %501 = vmatprep.subr.bf16.mxu0 0
      %502 = vmatpush1.bf16.msra.mxu0 0
      %503 = vmatprep.subr.bf16.mxu0 0
      %504 = vmatpush1.bf16.msra.mxu0 0
      %505 = vmatprep.subr.bf16.mxu0 0
      %506 = vmatpush1.bf16.msra.mxu0 0
      %507 = vmatprep.subr.bf16.mxu0 0
      %508 = vmatpush1.bf16.msra.mxu0 0
      %509 = vmatprep.subr.bf16.mxu0 0
      %510 = vmatpush1.bf16.msra.mxu0 0
      %511 = vmatprep.subr.bf16.mxu0 0
      %512 = vmatpush1.bf16.msra.mxu0 0
      %513 = vmatprep.subr.bf16.mxu0 0
      %514 = vmatpush1.bf16.msra.mxu0 0
      %515 = vmatprep.subr.bf16.mxu0 0
      %516 = vmatpush1.bf16.msra.mxu0 0
      %517 = vmatprep.subr.bf16.mxu0 0
      %518 = vmatpush1.bf16.msra.mxu0 0
      %519 = vmatprep.subr.bf16.mxu0 0
      %520 = vmatpush1.bf16.msra.mxu0 0
      %521 = vmatprep.subr.bf16.mxu0 0
      %522 = vmatpush1.bf16.msra.mxu0 0
      %523 = vmatprep.subr.bf16.mxu0 0
      %524 = vmatpush1.bf16.msra.mxu0 0
      %525 = vmatprep.mubr.bf16.mxu0 0
      %526 = vmatmul.mubr.bf16.gmra.mrb[0].mxu0 %v491
      %v527 = vpop.f32.mrb[0].mxu0
      %v528 = vadd.f32 0.0, %v527
      %v529 = vpop.f32.mrb[0].mxu0
      %v530 = vpop.f32.mrb[0].mxu0
      %v531 = vpop.f32.mrb[0].mxu0
      %532 = vdwg.mxu0
      %v533 = vadd.f32 %v465, %v528
      %s534 = scalar_lea.vmem %s240, 32
      %v535 = vld [vmem:[%s534] sm:$0xff]
      %537 = vset.pattern.permute.xlu0 0
      %538 = vperm.xlu0 %537, %v535
      %v539 = vpop.permute.xlu0 %538
      %v541 = vmul.f32 %v539, %v264
      %542 = vset.pattern.permute.xlu0 1
      %543 = vperm.xlu0 %542, %v535
      %v544 = vpop.permute.xlu0 %543
      %v546 = vmul.f32 %v544, %v273
      %v547 = vadd.f32 %v541, %v546
      %v548 = vpack.c.bf16 %v547, %v547
      %s549 = scalar_lea.vmem %s234, 32
      %v550 = vld [vmem:[%s549] sm:$0xf]
      %v551 = vld [vmem:[%s549 + $0x4] sm:$0xf]
      %v554 = vunpack.c.l.b16 %v550
      %v555 = vunpack.c.l.b16 %v551
      %v556 = vpack.c.b16 %v555, %v554
      %v559 = vsel %vm285, %v548, 0
      %561 = vmatprep.subr.bf16.mxu0 0
      %562 = vmatpush1.bf16.msra.mxu0 %v556
      %563 = vmatprep.subr.bf16.mxu0 0
      %564 = vmatpush1.bf16.msra.mxu0 0
      %565 = vmatprep.subr.bf16.mxu0 0
      %566 = vmatpush1.bf16.msra.mxu0 0
      %567 = vmatprep.subr.bf16.mxu0 0
      %568 = vmatpush1.bf16.msra.mxu0 0
      %569 = vmatprep.subr.bf16.mxu0 0
      %570 = vmatpush1.bf16.msra.mxu0 0
      %571 = vmatprep.subr.bf16.mxu0 0
      %572 = vmatpush1.bf16.msra.mxu0 0
      %573 = vmatprep.subr.bf16.mxu0 0
      %574 = vmatpush1.bf16.msra.mxu0 0
      %575 = vmatprep.subr.bf16.mxu0 0
      %576 = vmatpush1.bf16.msra.mxu0 0
      %577 = vmatprep.subr.bf16.mxu0 0
      %578 = vmatpush1.bf16.msra.mxu0 0
      %579 = vmatprep.subr.bf16.mxu0 0
      %580 = vmatpush1.bf16.msra.mxu0 0
      %581 = vmatprep.subr.bf16.mxu0 0
      %582 = vmatpush1.bf16.msra.mxu0 0
      %583 = vmatprep.subr.bf16.mxu0 0
      %584 = vmatpush1.bf16.msra.mxu0 0
      %585 = vmatprep.subr.bf16.mxu0 0
      %586 = vmatpush1.bf16.msra.mxu0 0
      %587 = vmatprep.subr.bf16.mxu0 0
      %588 = vmatpush1.bf16.msra.mxu0 0
      %589 = vmatprep.subr.bf16.mxu0 0
      %590 = vmatpush1.bf16.msra.mxu0 0
      %591 = vmatprep.subr.bf16.mxu0 0
      %592 = vmatpush1.bf16.msra.mxu0 0
      %593 = vmatprep.mubr.bf16.mxu0 0
      %594 = vmatmul.mubr.bf16.gmra.mrb[0].mxu0 %v559
      %v595 = vpop.f32.mrb[0].mxu0
      %v596 = vadd.f32 0.0, %v595
      %v597 = vpop.f32.mrb[0].mxu0
      %v598 = vpop.f32.mrb[0].mxu0
      %v599 = vpop.f32.mrb[0].mxu0
      %600 = vdwg.mxu0
      %v601 = vadd.f32 %v533, %v596
      %s602 = scalar_lea.vmem %s240, 40
      %v603 = vld [vmem:[%s602] sm:$0xff]
      %605 = vset.pattern.permute.xlu0 0
      %606 = vperm.xlu0 %605, %v603
      %v607 = vpop.permute.xlu0 %606
      %v609 = vmul.f32 %v607, %v264
      %610 = vset.pattern.permute.xlu0 1
      %611 = vperm.xlu0 %610, %v603
      %v612 = vpop.permute.xlu0 %611
      %v614 = vmul.f32 %v612, %v273
      %v615 = vadd.f32 %v609, %v614
      %v616 = vpack.c.bf16 %v615, %v615
      %s617 = scalar_lea.vmem %s234, 40
      %v618 = vld [vmem:[%s617] sm:$0xf]
      %v619 = vld [vmem:[%s617 + $0x4] sm:$0xf]
      %v622 = vunpack.c.l.b16 %v618
      %v623 = vunpack.c.l.b16 %v619
      %v624 = vpack.c.b16 %v623, %v622
      %v627 = vsel %vm285, %v616, 0
      %629 = vmatprep.subr.bf16.mxu0 0
      %630 = vmatpush1.bf16.msra.mxu0 %v624
      %631 = vmatprep.subr.bf16.mxu0 0
      %632 = vmatpush1.bf16.msra.mxu0 0
      %633 = vmatprep.subr.bf16.mxu0 0
      %634 = vmatpush1.bf16.msra.mxu0 0
      %635 = vmatprep.subr.bf16.mxu0 0
      %636 = vmatpush1.bf16.msra.mxu0 0
      %637 = vmatprep.subr.bf16.mxu0 0
      %638 = vmatpush1.bf16.msra.mxu0 0
      %639 = vmatprep.subr.bf16.mxu0 0
      %640 = vmatpush1.bf16.msra.mxu0 0
      %641 = vmatprep.subr.bf16.mxu0 0
      %642 = vmatpush1.bf16.msra.mxu0 0
      %643 = vmatprep.subr.bf16.mxu0 0
      %644 = vmatpush1.bf16.msra.mxu0 0
      %645 = vmatprep.subr.bf16.mxu0 0
      %646 = vmatpush1.bf16.msra.mxu0 0
      %647 = vmatprep.subr.bf16.mxu0 0
      %648 = vmatpush1.bf16.msra.mxu0 0
      %649 = vmatprep.subr.bf16.mxu0 0
      %650 = vmatpush1.bf16.msra.mxu0 0
      %651 = vmatprep.subr.bf16.mxu0 0
      %652 = vmatpush1.bf16.msra.mxu0 0
      %653 = vmatprep.subr.bf16.mxu0 0
      %654 = vmatpush1.bf16.msra.mxu0 0
      %655 = vmatprep.subr.bf16.mxu0 0
      %656 = vmatpush1.bf16.msra.mxu0 0
      %657 = vmatprep.subr.bf16.mxu0 0
      %658 = vmatpush1.bf16.msra.mxu0 0
      %659 = vmatprep.subr.bf16.mxu0 0
      %660 = vmatpush1.bf16.msra.mxu0 0
      %661 = vmatprep.mubr.bf16.mxu0 0
      %662 = vmatmul.mubr.bf16.gmra.mrb[0].mxu0 %v627
      %v663 = vpop.f32.mrb[0].mxu0
      %v664 = vadd.f32 0.0, %v663
      %v665 = vpop.f32.mrb[0].mxu0
      %v666 = vpop.f32.mrb[0].mxu0
      %v667 = vpop.f32.mrb[0].mxu0
      %668 = vdwg.mxu0
      %v669 = vadd.f32 %v601, %v664
      %s670 = scalar_lea.vmem %s240, 48
      %v671 = vld [vmem:[%s670] sm:$0xff]
      %673 = vset.pattern.permute.xlu0 0
      %674 = vperm.xlu0 %673, %v671
      %v675 = vpop.permute.xlu0 %674
      %v677 = vmul.f32 %v675, %v264
      %678 = vset.pattern.permute.xlu0 1
      %679 = vperm.xlu0 %678, %v671
      %v680 = vpop.permute.xlu0 %679
      %v682 = vmul.f32 %v680, %v273
      %v683 = vadd.f32 %v677, %v682
      %v684 = vpack.c.bf16 %v683, %v683
      %s685 = scalar_lea.vmem %s234, 48
      %v686 = vld [vmem:[%s685] sm:$0xf]
      %v687 = vld [vmem:[%s685 + $0x4] sm:$0xf]
      %v690 = vunpack.c.l.b16 %v686
      %v691 = vunpack.c.l.b16 %v687
      %v692 = vpack.c.b16 %v691, %v690
      %v695 = vsel %vm285, %v684, 0
      %697 = vmatprep.subr.bf16.mxu0 0
      %698 = vmatpush1.bf16.msra.mxu0 %v692
      %699 = vmatprep.subr.bf16.mxu0 0
      %700 = vmatpush1.bf16.msra.mxu0 0
      %701 = vmatprep.subr.bf16.mxu0 0
      %702 = vmatpush1.bf16.msra.mxu0 0
      %703 = vmatprep.subr.bf16.mxu0 0
      %704 = vmatpush1.bf16.msra.mxu0 0
      %705 = vmatprep.subr.bf16.mxu0 0
      %706 = vmatpush1.bf16.msra.mxu0 0
      %707 = vmatprep.subr.bf16.mxu0 0
      %708 = vmatpush1.bf16.msra.mxu0 0
      %709 = vmatprep.subr.bf16.mxu0 0
      %710 = vmatpush1.bf16.msra.mxu0 0
      %711 = vmatprep.subr.bf16.mxu0 0
      %712 = vmatpush1.bf16.msra.mxu0 0
      %713 = vmatprep.subr.bf16.mxu0 0
      %714 = vmatpush1.bf16.msra.mxu0 0
      %715 = vmatprep.subr.bf16.mxu0 0
      %716 = vmatpush1.bf16.msra.mxu0 0
      %717 = vmatprep.subr.bf16.mxu0 0
      %718 = vmatpush1.bf16.msra.mxu0 0
      %719 = vmatprep.subr.bf16.mxu0 0
      %720 = vmatpush1.bf16.msra.mxu0 0
      %721 = vmatprep.subr.bf16.mxu0 0
      %722 = vmatpush1.bf16.msra.mxu0 0
      %723 = vmatprep.subr.bf16.mxu0 0
      %724 = vmatpush1.bf16.msra.mxu0 0
      %725 = vmatprep.subr.bf16.mxu0 0
      %726 = vmatpush1.bf16.msra.mxu0 0
      %727 = vmatprep.subr.bf16.mxu0 0
      %728 = vmatpush1.bf16.msra.mxu0 0
      %729 = vmatprep.mubr.bf16.mxu0 0
      %730 = vmatmul.mubr.bf16.gmra.mrb[0].mxu0 %v695
      %v731 = vpop.f32.mrb[0].mxu0
      %v732 = vadd.f32 0.0, %v731
      %v733 = vpop.f32.mrb[0].mxu0
      %v734 = vpop.f32.mrb[0].mxu0
      %v735 = vpop.f32.mrb[0].mxu0
      %736 = vdwg.mxu0
      %v737 = vadd.f32 %v669, %v732
      %s738 = scalar_lea.vmem %s240, 56
      %v739 = vld [vmem:[%s738] sm:$0xff]
      %741 = vset.pattern.permute.xlu0 0
      %742 = vperm.xlu0 %741, %v739
      %v743 = vpop.permute.xlu0 %742
      %v745 = vmul.f32 %v743, %v264
      %746 = vset.pattern.permute.xlu0 1
      %747 = vperm.xlu0 %746, %v739
      %v748 = vpop.permute.xlu0 %747
      %v750 = vmul.f32 %v748, %v273
      %v751 = vadd.f32 %v745, %v750
      %v752 = vpack.c.bf16 %v751, %v751
      %s753 = scalar_lea.vmem %s234, 56
      %v754 = vld [vmem:[%s753] sm:$0xf]
      %v755 = vld [vmem:[%s753 + $0x4] sm:$0xf]
      %v758 = vunpack.c.l.b16 %v754
      %v759 = vunpack.c.l.b16 %v755
      %v760 = vpack.c.b16 %v759, %v758
      %v763 = vsel %vm285, %v752, 0
      %765 = vmatprep.subr.bf16.mxu0 0
      %766 = vmatpush1.bf16.msra.mxu0 %v760
      %767 = vmatprep.subr.bf16.mxu0 0
      %768 = vmatpush1.bf16.msra.mxu0 0
      %769 = vmatprep.subr.bf16.mxu0 0
      %770 = vmatpush1.bf16.msra.mxu0 0
      %771 = vmatprep.subr.bf16.mxu0 0
      %772 = vmatpush1.bf16.msra.mxu0 0
      %773 = vmatprep.subr.bf16.mxu0 0
      %774 = vmatpush1.bf16.msra.mxu0 0
      %775 = vmatprep.subr.bf16.mxu0 0
      %776 = vmatpush1.bf16.msra.mxu0 0
      %777 = vmatprep.subr.bf16.mxu0 0
      %778 = vmatpush1.bf16.msra.mxu0 0
      %779 = vmatprep.subr.bf16.mxu0 0
      %780 = vmatpush1.bf16.msra.mxu0 0
      %781 = vmatprep.subr.bf16.mxu0 0
      %782 = vmatpush1.bf16.msra.mxu0 0
      %783 = vmatprep.subr.bf16.mxu0 0
      %784 = vmatpush1.bf16.msra.mxu0 0
      %785 = vmatprep.subr.bf16.mxu0 0
      %786 = vmatpush1.bf16.msra.mxu0 0
      %787 = vmatprep.subr.bf16.mxu0 0
      %788 = vmatpush1.bf16.msra.mxu0 0
      %789 = vmatprep.subr.bf16.mxu0 0
      %790 = vmatpush1.bf16.msra.mxu0 0
      %791 = vmatprep.subr.bf16.mxu0 0
      %792 = vmatpush1.bf16.msra.mxu0 0
      %793 = vmatprep.subr.bf16.mxu0 0
      %794 = vmatpush1.bf16.msra.mxu0 0
      %795 = vmatprep.subr.bf16.mxu0 0
      %796 = vmatpush1.bf16.msra.mxu0 0
      %797 = vmatprep.mubr.bf16.mxu0 0
      %798 = vmatmul.mubr.bf16.gmra.mrb[0].mxu0 %v763
      %v799 = vpop.f32.mrb[0].mxu0
      %v800 = vadd.f32 0.0, %v799
      %v801 = vpop.f32.mrb[0].mxu0
      %v802 = vpop.f32.mrb[0].mxu0
      %v803 = vpop.f32.mrb[0].mxu0
      %804 = vdwg.mxu0
      %v805 = vadd.f32 %v737, %v800
      %s806 = scalar_lea.vmem %s240, 64
      %v807 = vld [vmem:[%s806] sm:$0xff]
      %809 = vset.pattern.permute.xlu0 0
      %810 = vperm.xlu0 %809, %v807
      %v811 = vpop.permute.xlu0 %810
      %v813 = vmul.f32 %v811, %v264
      %814 = vset.pattern.permute.xlu0 1
      %815 = vperm.xlu0 %814, %v807
      %v816 = vpop.permute.xlu0 %815
      %v818 = vmul.f32 %v816, %v273
      %v819 = vadd.f32 %v813, %v818
      %v820 = vpack.c.bf16 %v819, %v819
      %s821 = scalar_lea.vmem %s234, 64
      %v822 = vld [vmem:[%s821] sm:$0xf]
      %v823 = vld [vmem:[%s821 + $0x4] sm:$0xf]
      %v826 = vunpack.c.l.b16 %v822
      %v827 = vunpack.c.l.b16 %v823
      %v828 = vpack.c.b16 %v827, %v826
      %v831 = vsel %vm285, %v820, 0
      %833 = vmatprep.subr.bf16.mxu0 0
      %834 = vmatpush1.bf16.msra.mxu0 %v828
      %835 = vmatprep.subr.bf16.mxu0 0
      %836 = vmatpush1.bf16.msra.mxu0 0
      %837 = vmatprep.subr.bf16.mxu0 0
      %838 = vmatpush1.bf16.msra.mxu0 0
      %839 = vmatprep.subr.bf16.mxu0 0
      %840 = vmatpush1.bf16.msra.mxu0 0
      %841 = vmatprep.subr.bf16.mxu0 0
      %842 = vmatpush1.bf16.msra.mxu0 0
      %843 = vmatprep.subr.bf16.mxu0 0
      %844 = vmatpush1.bf16.msra.mxu0 0
      %845 = vmatprep.subr.bf16.mxu0 0
      %846 = vmatpush1.bf16.msra.mxu0 0
      %847 = vmatprep.subr.bf16.mxu0 0
      %848 = vmatpush1.bf16.msra.mxu0 0
      %849 = vmatprep.subr.bf16.mxu0 0
      %850 = vmatpush1.bf16.msra.mxu0 0
      %851 = vmatprep.subr.bf16.mxu0 0
      %852 = vmatpush1.bf16.msra.mxu0 0
      %853 = vmatprep.subr.bf16.mxu0 0
      %854 = vmatpush1.bf16.msra.mxu0 0
      %855 = vmatprep.subr.bf16.mxu0 0
      %856 = vmatpush1.bf16.msra.mxu0 0
      %857 = vmatprep.subr.bf16.mxu0 0
      %858 = vmatpush1.bf16.msra.mxu0 0
      %859 = vmatprep.subr.bf16.mxu0 0
      %860 = vmatpush1.bf16.msra.mxu0 0
      %861 = vmatprep.subr.bf16.mxu0 0
      %862 = vmatpush1.bf16.msra.mxu0 0
      %863 = vmatprep.subr.bf16.mxu0 0
      %864 = vmatpush1.bf16.msra.mxu0 0
      %865 = vmatprep.mubr.bf16.mxu0 0
      %866 = vmatmul.mubr.bf16.gmra.mrb[0].mxu0 %v831
      %v867 = vpop.f32.mrb[0].mxu0
      %v868 = vadd.f32 0.0, %v867
      %v869 = vpop.f32.mrb[0].mxu0
      %v870 = vpop.f32.mrb[0].mxu0
      %v871 = vpop.f32.mrb[0].mxu0
      %872 = vdwg.mxu0
      %v873 = vadd.f32 %v805, %v868
      %s874 = scalar_lea.vmem %s240, 72
      %v875 = vld [vmem:[%s874] sm:$0xff]
      %877 = vset.pattern.permute.xlu0 0
      %878 = vperm.xlu0 %877, %v875
      %v879 = vpop.permute.xlu0 %878
      %v881 = vmul.f32 %v879, %v264
      %882 = vset.pattern.permute.xlu0 1
      %883 = vperm.xlu0 %882, %v875
      %v884 = vpop.permute.xlu0 %883
      %v886 = vmul.f32 %v884, %v273
      %v887 = vadd.f32 %v881, %v886
      %v888 = vpack.c.bf16 %v887, %v887
      %s889 = scalar_lea.vmem %s234, 72
      %v890 = vld [vmem:[%s889] sm:$0xf]
      %v891 = vld [vmem:[%s889 + $0x4] sm:$0xf]
      %v894 = vunpack.c.l.b16 %v890
      %v895 = vunpack.c.l.b16 %v891
      %v896 = vpack.c.b16 %v895, %v894
      %v899 = vsel %vm285, %v888, 0
      %901 = vmatprep.subr.bf16.mxu0 0
      %902 = vmatpush1.bf16.msra.mxu0 %v896
      %903 = vmatprep.subr.bf16.mxu0 0
      %904 = vmatpush1.bf16.msra.mxu0 0
      %905 = vmatprep.subr.bf16.mxu0 0
      %906 = vmatpush1.bf16.msra.mxu0 0
      %907 = vmatprep.subr.bf16.mxu0 0
      %908 = vmatpush1.bf16.msra.mxu0 0
      %909 = vmatprep.subr.bf16.mxu0 0
      %910 = vmatpush1.bf16.msra.mxu0 0
      %911 = vmatprep.subr.bf16.mxu0 0
      %912 = vmatpush1.bf16.msra.mxu0 0
      %913 = vmatprep.subr.bf16.mxu0 0
      %914 = vmatpush1.bf16.msra.mxu0 0
      %915 = vmatprep.subr.bf16.mxu0 0
      %916 = vmatpush1.bf16.msra.mxu0 0
      %917 = vmatprep.subr.bf16.mxu0 0
      %918 = vmatpush1.bf16.msra.mxu0 0
      %919 = vmatprep.subr.bf16.mxu0 0
      %920 = vmatpush1.bf16.msra.mxu0 0
      %921 = vmatprep.subr.bf16.mxu0 0
      %922 = vmatpush1.bf16.msra.mxu0 0
      %923 = vmatprep.subr.bf16.mxu0 0
      %924 = vmatpush1.bf16.msra.mxu0 0
      %925 = vmatprep.subr.bf16.mxu0 0
      %926 = vmatpush1.bf16.msra.mxu0 0
      %927 = vmatprep.subr.bf16.mxu0 0
      %928 = vmatpush1.bf16.msra.mxu0 0
      %929 = vmatprep.subr.bf16.mxu0 0
      %930 = vmatpush1.bf16.msra.mxu0 0
      %931 = vmatprep.subr.bf16.mxu0 0
      %932 = vmatpush1.bf16.msra.mxu0 0
      %933 = vmatprep.mubr.bf16.mxu0 0
      %934 = vmatmul.mubr.bf16.gmra.mrb[0].mxu0 %v899
      %v935 = vpop.f32.mrb[0].mxu0
      %v936 = vadd.f32 0.0, %v935
      %v937 = vpop.f32.mrb[0].mxu0
      %v938 = vpop.f32.mrb[0].mxu0
      %v939 = vpop.f32.mrb[0].mxu0
      %940 = vdwg.mxu0
      %v941 = vadd.f32 %v873, %v936
      %s942 = scalar_lea.vmem %s240, 80
      %v943 = vld [vmem:[%s942] sm:$0xff]
      %945 = vset.pattern.permute.xlu0 0
      %946 = vperm.xlu0 %945, %v943
      %v947 = vpop.permute.xlu0 %946
      %v949 = vmul.f32 %v947, %v264
      %950 = vset.pattern.permute.xlu0 1
      %951 = vperm.xlu0 %950, %v943
      %v952 = vpop.permute.xlu0 %951
      %v954 = vmul.f32 %v952, %v273
      %v955 = vadd.f32 %v949, %v954
      %v956 = vpack.c.bf16 %v955, %v955
      %s957 = scalar_lea.vmem %s234, 80
      %v958 = vld [vmem:[%s957] sm:$0xf]
      %v959 = vld [vmem:[%s957 + $0x4] sm:$0xf]
      %v962 = vunpack.c.l.b16 %v958
      %v963 = vunpack.c.l.b16 %v959
      %v964 = vpack.c.b16 %v963, %v962
      %v967 = vsel %vm285, %v956, 0
      %969 = vmatprep.subr.bf16.mxu0 0
      %970 = vmatpush1.bf16.msra.mxu0 %v964
      %971 = vmatprep.subr.bf16.mxu0 0
      %972 = vmatpush1.bf16.msra.mxu0 0
      %973 = vmatprep.subr.bf16.mxu0 0
      %974 = vmatpush1.bf16.msra.mxu0 0
      %975 = vmatprep.subr.bf16.mxu0 0
      %976 = vmatpush1.bf16.msra.mxu0 0
      %977 = vmatprep.subr.bf16.mxu0 0
      %978 = vmatpush1.bf16.msra.mxu0 0
      %979 = vmatprep.subr.bf16.mxu0 0
      %980 = vmatpush1.bf16.msra.mxu0 0
      %981 = vmatprep.subr.bf16.mxu0 0
      %982 = vmatpush1.bf16.msra.mxu0 0
      %983 = vmatprep.subr.bf16.mxu0 0
      %984 = vmatpush1.bf16.msra.mxu0 0
      %985 = vmatprep.subr.bf16.mxu0 0
      %986 = vmatpush1.bf16.msra.mxu0 0
      %987 = vmatprep.subr.bf16.mxu0 0
      %988 = vmatpush1.bf16.msra.mxu0 0
      %989 = vmatprep.subr.bf16.mxu0 0
      %990 = vmatpush1.bf16.msra.mxu0 0
      %991 = vmatprep.subr.bf16.mxu0 0
      %992 = vmatpush1.bf16.msra.mxu0 0
      %993 = vmatprep.subr.bf16.mxu0 0
      %994 = vmatpush1.bf16.msra.mxu0 0
      %995 = vmatprep.subr.bf16.mxu0 0
      %996 = vmatpush1.bf16.msra.mxu0 0
      %997 = vmatprep.subr.bf16.mxu0 0
      %998 = vmatpush1.bf16.msra.mxu0 0
      %999 = vmatprep.subr.bf16.mxu0 0
      %1000 = vmatpush1.bf16.msra.mxu0 0
      %1001 = vmatprep.mubr.bf16.mxu0 0
      %1002 = vmatmul.mubr.bf16.gmra.mrb[0].mxu0 %v967
      %v1003 = vpop.f32.mrb[0].mxu0
      %v1004 = vadd.f32 0.0, %v1003
      %v1005 = vpop.f32.mrb[0].mxu0
      %v1006 = vpop.f32.mrb[0].mxu0
      %v1007 = vpop.f32.mrb[0].mxu0
      %1008 = vdwg.mxu0
      %v1009 = vadd.f32 %v941, %v1004
      %s1010 = scalar_lea.vmem %s240, 88
      %v1011 = vld [vmem:[%s1010] sm:$0xff]
      %1013 = vset.pattern.permute.xlu0 0
      %1014 = vperm.xlu0 %1013, %v1011
      %v1015 = vpop.permute.xlu0 %1014
      %v1017 = vmul.f32 %v1015, %v264
      %1018 = vset.pattern.permute.xlu0 1
      %1019 = vperm.xlu0 %1018, %v1011
      %v1020 = vpop.permute.xlu0 %1019
      %v1022 = vmul.f32 %v1020, %v273
      %v1023 = vadd.f32 %v1017, %v1022
      %v1024 = vpack.c.bf16 %v1023, %v1023
      %s1025 = scalar_lea.vmem %s234, 88
      %v1026 = vld [vmem:[%s1025] sm:$0xf]
      %v1027 = vld [vmem:[%s1025 + $0x4] sm:$0xf]
      %v1030 = vunpack.c.l.b16 %v1026
      %v1031 = vunpack.c.l.b16 %v1027
      %v1032 = vpack.c.b16 %v1031, %v1030
      %v1035 = vsel %vm285, %v1024, 0
      %1037 = vmatprep.subr.bf16.mxu0 0
      %1038 = vmatpush1.bf16.msra.mxu0 %v1032
      %1039 = vmatprep.subr.bf16.mxu0 0
      %1040 = vmatpush1.bf16.msra.mxu0 0
      %1041 = vmatprep.subr.bf16.mxu0 0
      %1042 = vmatpush1.bf16.msra.mxu0 0
      %1043 = vmatprep.subr.bf16.mxu0 0
      %1044 = vmatpush1.bf16.msra.mxu0 0
      %1045 = vmatprep.subr.bf16.mxu0 0
      %1046 = vmatpush1.bf16.msra.mxu0 0
      %1047 = vmatprep.subr.bf16.mxu0 0
      %1048 = vmatpush1.bf16.msra.mxu0 0
      %1049 = vmatprep.subr.bf16.mxu0 0
      %1050 = vmatpush1.bf16.msra.mxu0 0
      %1051 = vmatprep.subr.bf16.mxu0 0
      %1052 = vmatpush1.bf16.msra.mxu0 0
      %1053 = vmatprep.subr.bf16.mxu0 0
      %1054 = vmatpush1.bf16.msra.mxu0 0
      %1055 = vmatprep.subr.bf16.mxu0 0
      %1056 = vmatpush1.bf16.msra.mxu0 0
      %1057 = vmatprep.subr.bf16.mxu0 0
      %1058 = vmatpush1.bf16.msra.mxu0 0
      %1059 = vmatprep.subr.bf16.mxu0 0
      %1060 = vmatpush1.bf16.msra.mxu0 0
      %1061 = vmatprep.subr.bf16.mxu0 0
      %1062 = vmatpush1.bf16.msra.mxu0 0
      %1063 = vmatprep.subr.bf16.mxu0 0
      %1064 = vmatpush1.bf16.msra.mxu0 0
      %1065 = vmatprep.subr.bf16.mxu0 0
      %1066 = vmatpush1.bf16.msra.mxu0 0
      %1067 = vmatprep.subr.bf16.mxu0 0
      %1068 = vmatpush1.bf16.msra.mxu0 0
      %1069 = vmatprep.mubr.bf16.mxu0 0
      %1070 = vmatmul.mubr.bf16.gmra.mrb[0].mxu0 %v1035
      %v1071 = vpop.f32.mrb[0].mxu0
      %v1072 = vadd.f32 0.0, %v1071
      %v1073 = vpop.f32.mrb[0].mxu0
      %v1074 = vpop.f32.mrb[0].mxu0
      %v1075 = vpop.f32.mrb[0].mxu0
      %1076 = vdwg.mxu0
      %v1077 = vadd.f32 %v1009, %v1072
      %s1078 = scalar_lea.vmem %s240, 96
      %v1079 = vld [vmem:[%s1078] sm:$0xff]
      %1081 = vset.pattern.permute.xlu0 0
      %1082 = vperm.xlu0 %1081, %v1079
      %v1083 = vpop.permute.xlu0 %1082
      %v1085 = vmul.f32 %v1083, %v264
      %1086 = vset.pattern.permute.xlu0 1
      %1087 = vperm.xlu0 %1086, %v1079
      %v1088 = vpop.permute.xlu0 %1087
      %v1090 = vmul.f32 %v1088, %v273
      %v1091 = vadd.f32 %v1085, %v1090
      %v1092 = vpack.c.bf16 %v1091, %v1091
      %s1093 = scalar_lea.vmem %s234, 96
      %v1094 = vld [vmem:[%s1093] sm:$0xf]
      %v1095 = vld [vmem:[%s1093 + $0x4] sm:$0xf]
      %v1098 = vunpack.c.l.b16 %v1094
      %v1099 = vunpack.c.l.b16 %v1095
      %v1100 = vpack.c.b16 %v1099, %v1098
      %v1103 = vsel %vm285, %v1092, 0
      %1105 = vmatprep.subr.bf16.mxu0 0
      %1106 = vmatpush1.bf16.msra.mxu0 %v1100
      %1107 = vmatprep.subr.bf16.mxu0 0
      %1108 = vmatpush1.bf16.msra.mxu0 0
      %1109 = vmatprep.subr.bf16.mxu0 0
      %1110 = vmatpush1.bf16.msra.mxu0 0
      %1111 = vmatprep.subr.bf16.mxu0 0
      %1112 = vmatpush1.bf16.msra.mxu0 0
      %1113 = vmatprep.subr.bf16.mxu0 0
      %1114 = vmatpush1.bf16.msra.mxu0 0
      %1115 = vmatprep.subr.bf16.mxu0 0
      %1116 = vmatpush1.bf16.msra.mxu0 0
      %1117 = vmatprep.subr.bf16.mxu0 0
      %1118 = vmatpush1.bf16.msra.mxu0 0
      %1119 = vmatprep.subr.bf16.mxu0 0
      %1120 = vmatpush1.bf16.msra.mxu0 0
      %1121 = vmatprep.subr.bf16.mxu0 0
      %1122 = vmatpush1.bf16.msra.mxu0 0
      %1123 = vmatprep.subr.bf16.mxu0 0
      %1124 = vmatpush1.bf16.msra.mxu0 0
      %1125 = vmatprep.subr.bf16.mxu0 0
      %1126 = vmatpush1.bf16.msra.mxu0 0
      %1127 = vmatprep.subr.bf16.mxu0 0
      %1128 = vmatpush1.bf16.msra.mxu0 0
      %1129 = vmatprep.subr.bf16.mxu0 0
      %1130 = vmatpush1.bf16.msra.mxu0 0
      %1131 = vmatprep.subr.bf16.mxu0 0
      %1132 = vmatpush1.bf16.msra.mxu0 0
      %1133 = vmatprep.subr.bf16.mxu0 0
      %1134 = vmatpush1.bf16.msra.mxu0 0
      %1135 = vmatprep.subr.bf16.mxu0 0
      %1136 = vmatpush1.bf16.msra.mxu0 0
      %1137 = vmatprep.mubr.bf16.mxu0 0
      %1138 = vmatmul.mubr.bf16.gmra.mrb[0].mxu0 %v1103
      %v1139 = vpop.f32.mrb[0].mxu0
      %v1140 = vadd.f32 0.0, %v1139
      %v1141 = vpop.f32.mrb[0].mxu0
      %v1142 = vpop.f32.mrb[0].mxu0
      %v1143 = vpop.f32.mrb[0].mxu0
      %1144 = vdwg.mxu0
      %v1145 = vadd.f32 %v1077, %v1140
      %s1146 = scalar_lea.vmem %s240, 104
      %v1147 = vld [vmem:[%s1146] sm:$0xff]
      %1149 = vset.pattern.permute.xlu0 0
      %1150 = vperm.xlu0 %1149, %v1147
      %v1151 = vpop.permute.xlu0 %1150
      %v1153 = vmul.f32 %v1151, %v264
      %1154 = vset.pattern.permute.xlu0 1
      %1155 = vperm.xlu0 %1154, %v1147
      %v1156 = vpop.permute.xlu0 %1155
      %v1158 = vmul.f32 %v1156, %v273
      %v1159 = vadd.f32 %v1153, %v1158
      %v1160 = vpack.c.bf16 %v1159, %v1159
      %s1161 = scalar_lea.vmem %s234, 104
      %v1162 = vld [vmem:[%s1161] sm:$0xf]
      %v1163 = vld [vmem:[%s1161 + $0x4] sm:$0xf]
      %v1166 = vunpack.c.l.b16 %v1162
      %v1167 = vunpack.c.l.b16 %v1163
      %v1168 = vpack.c.b16 %v1167, %v1166
      %v1171 = vsel %vm285, %v1160, 0
      %1173 = vmatprep.subr.bf16.mxu0 0
      %1174 = vmatpush1.bf16.msra.mxu0 %v1168
      %1175 = vmatprep.subr.bf16.mxu0 0
      %1176 = vmatpush1.bf16.msra.mxu0 0
      %1177 = vmatprep.subr.bf16.mxu0 0
      %1178 = vmatpush1.bf16.msra.mxu0 0
      %1179 = vmatprep.subr.bf16.mxu0 0
      %1180 = vmatpush1.bf16.msra.mxu0 0
      %1181 = vmatprep.subr.bf16.mxu0 0
      %1182 = vmatpush1.bf16.msra.mxu0 0
      %1183 = vmatprep.subr.bf16.mxu0 0
      %1184 = vmatpush1.bf16.msra.mxu0 0
      %1185 = vmatprep.subr.bf16.mxu0 0
      %1186 = vmatpush1.bf16.msra.mxu0 0
      %1187 = vmatprep.subr.bf16.mxu0 0
      %1188 = vmatpush1.bf16.msra.mxu0 0
      %1189 = vmatprep.subr.bf16.mxu0 0
      %1190 = vmatpush1.bf16.msra.mxu0 0
      %1191 = vmatprep.subr.bf16.mxu0 0
      %1192 = vmatpush1.bf16.msra.mxu0 0
      %1193 = vmatprep.subr.bf16.mxu0 0
      %1194 = vmatpush1.bf16.msra.mxu0 0
      %1195 = vmatprep.subr.bf16.mxu0 0
      %1196 = vmatpush1.bf16.msra.mxu0 0
      %1197 = vmatprep.subr.bf16.mxu0 0
      %1198 = vmatpush1.bf16.msra.mxu0 0
      %1199 = vmatprep.subr.bf16.mxu0 0
      %1200 = vmatpush1.bf16.msra.mxu0 0
      %1201 = vmatprep.subr.bf16.mxu0 0
      %1202 = vmatpush1.bf16.msra.mxu0 0
      %1203 = vmatprep.subr.bf16.mxu0 0
      %1204 = vmatpush1.bf16.msra.mxu0 0
      %1205 = vmatprep.mubr.bf16.mxu0 0
      %1206 = vmatmul.mubr.bf16.gmra.mrb[0].mxu0 %v1171
      %v1207 = vpop.f32.mrb[0].mxu0
      %v1208 = vadd.f32 0.0, %v1207
      %v1209 = vpop.f32.mrb[0].mxu0
      %v1210 = vpop.f32.mrb[0].mxu0
      %v1211 = vpop.f32.mrb[0].mxu0
      %1212 = vdwg.mxu0
      %v1213 = vadd.f32 %v1145, %v1208
      %1214 = vst.msk [vmem:[%s245] sm:$0xff] %vm285, %v1213
      %p1215 = scmp.eq.s32.totalorder %s20, 1
      // Predicated region
      $region41: #{mynet_forward.2} parent=35 // pred_check
        %p1216 = pneg %p1215
      $region42: #{mynet_forward.2} parent=35 // pred_check_branch
        %1218 = sbr.rel (%p1216) target = $region44
      $region43: #{mynet_forward.2} parent=35 // pred_region
        %v1219 = vld [vmem:[%s245] sm:$0xff]
        %v1220 = vld [vmem:[%s3] sm:$0xff]
        %1222 = vset.pattern.permute.xlu0 0
        %1223 = vperm.xlu0 %1222, %v1220
        %v1224 = vpop.permute.xlu0 %1223
        %v1226 = vadd.f32 %v1219, %v1224
        %v1227 = vmax.f32 %v1226, 0.0
        %1228 = vst.msk [vmem:[%s245] sm:$0xff] %vm285, %v1227
      $region44: #{mynet_forward.2} parent=35 // pred_fallthru
        _
      %p1229 = scmp.lt.s32.totalorder %s19, 0
      %s1230 = scalar_select %p1229, %s19, 0
      %s1231 = smul.addr %s1230, 8
      %s1232 = scalar_lea.vmem %s4, %s1231
      // Predicated region
      $region45: #{mynet_forward.2} parent=35 // pred_check
        %p1233 = pneg %p141
      $region46: #{mynet_forward.2} parent=35 // pred_check_branch
        %1235 = sbr.rel (%p1233) target = $region48
      $region47: #{mynet_forward.2} parent=35 // pred_region
        _
      $region48: #{mynet_forward.2} parent=35 // pred_fallthru
        _
      // Predicated region
      $region49: #{mynet_forward.2} parent=35 // pred_check
        %p1236 = pneg %p141
      $region50: #{mynet_forward.2} parent=35 // pred_check_branch
        %1238 = sbr.rel (%p1236) target = $region52
      $region51: #{mynet_forward.2} parent=35 // pred_region
        %p1239 = scmp.lt.s32.totalorder %s19, 0
        %s1240 = scalar_select %p1239, %s19, 0
        %s1241 = smul.addr %s1240, 8
        %s1242 = scalar_lea.vmem %s4, %s1241
      $region52: #{mynet_forward.2} parent=35 // pred_fallthru
        _
    $region36: #{mynet_forward.2} parent=5 // pred_fallthru
      _
    %p1243 = scmp.le.s32.totalorder 2, %s10
    // Predicated region
    $region53: #{mynet_forward.2} parent=5 // pred_check
      %p1244 = pneg %p1243
    $region54: #{mynet_forward.2} parent=5 // pred_check_branch
      %1246 = sbr.rel (%p1244) target = $region56
    $region55: #{mynet_forward.2} parent=5 // pred_region
      %s1247 = ssub.s32 %s10, 2
    $region56: #{mynet_forward.2} parent=5 // pred_fallthru
      _
  $region6: #{mynet_forward.2} parent=0 // loop_footer
    %s14 = sadd.s32 1, %s10
  $region7: #{mynet_forward.2} parent=0 // loop_footer_branch
    %9 = sbr.rel target = $region3
  $region8: #{mynet_forward.2} parent=0 // loop_exit
    _

</llo_original>
